<compile_context>
chip_gen: v5e
topology: v5e:2x2
jax: 0.10.0
libtpu: 0.0.40
codegen_flags: <defaults>
</compile_context>

<pallas_src>
import functools

import numpy as np
import jax
import jax.numpy as jnp
from jax import lax
from jax.experimental import pallas as pl
from jax.experimental.pallas import tpu as pltpu


# ----------------------------- helpers (glue) -----------------------------

def _round_up(x, m):
    return (x + m - 1) // m * m


def _hann_window(win):
    n = np.arange(win)
    return (0.5 - 0.5 * np.cos(2.0 * np.pi * n / win)).astype(np.float32)


def _dft_matrices(win):
    # One-sided DFT: X[k] = sum_n x[n] * exp(-2i*pi*n*k/win), k = 0..win//2
    f = win // 2 + 1
    n = np.arange(win)[:, None].astype(np.float64)
    k = np.arange(f)[None, :].astype(np.float64)
    ang = 2.0 * np.pi * n * k / win
    return np.cos(ang).astype(np.float32), (-np.sin(ang)).astype(np.float32)


def _hz_to_mel(f):
    return 2595.0 * np.log10(1.0 + f / 700.0)


def _mel_to_hz(m):
    return 700.0 * (10.0 ** (m / 2595.0) - 1.0)


def _mel_filterbank(n_mels, win, sr, fmin, fmax):
    # Deterministic synthetic HTK-style triangular mel filterbank, [F, n_mels].
    # TODO(synk): librosa's Slaney-normalized filterbank (used by audiotools)
    # is not reproduced bit-exactly; this is a deterministic stand-in.
    f = win // 2 + 1
    fmax = sr / 2.0 if fmax is None else fmax
    mel_pts = np.linspace(_hz_to_mel(fmin), _hz_to_mel(fmax), n_mels + 2)
    hz_pts = _mel_to_hz(mel_pts)
    bin_freqs = np.arange(f) * sr / win
    fb = np.zeros((f, n_mels), dtype=np.float32)
    for m in range(n_mels):
        f_lo, f_c, f_hi = hz_pts[m], hz_pts[m + 1], hz_pts[m + 2]
        up = (bin_freqs - f_lo) / max(f_c - f_lo, 1e-8)
        dn = (f_hi - bin_freqs) / max(f_hi - f_c, 1e-8)
        fb[:, m] = np.maximum(0.0, np.minimum(up, dn)).astype(np.float32)
    return fb


def _num_frames(t, win, hop):
    # torch.stft center=True: pad = win // 2 on both sides.
    return (t + 2 * (win // 2) - win) // hop + 1


def _pick_tile_n(n, frame_tile):
    # Prefer big tiles (amortize ~0.35us/step overhead, fill the 256-wide MXU
    # since effective M = 2*tile_n), but keep >= ~6 tiles so the "parallel"
    # grid axis load-balances across v7x's two TensorCores; tiny inputs get a
    # single minimally padded tile.
    if n >= 6 * frame_tile:
        return frame_tile
    if n > 128:
        return 128
    return max(8, _round_up(n, 8))


def _frames_bf16(wav, win, hop, n_pad):
    """wav [B,C,T] -> bf16 frames [n_pad, win] (STFT center=True, reflect pad).

    hop divides win (hop = win//4), so framing is win//hop shifted hop-chunk
    reshapes + a lane concat -- no gather, no int32 index tensor.  Rows >= the
    true frame count are zero and contribute exactly 0 to both loss terms.
    """
    b, c, t = wav.shape
    assert win % hop == 0, "hop must divide the window length"
    # TODO(synk): reflect padding requires T > win // 2 (as in torch.stft).
    pad = win // 2
    steps = win // hop
    x = jnp.pad(wav, ((0, 0), (0, 0), (pad, pad)), mode="reflect")
    tp = t + 2 * pad
    n_frames = (tp - win) // hop + 1
    tp_pad = max(_round_up(tp, hop), (n_frames + steps - 1) * hop)
    x = jnp.pad(x, ((0, 0), (0, 0), (0, tp_pad - tp))).astype(jnp.bfloat16)
    chunks = x.reshape(b, c, tp_pad // hop, hop)
    frames = jnp.concatenate(
        [chunks[:, :, s:s + n_frames, :] for s in range(steps)], axis=-1)
    frames = frames.reshape(b * c * n_frames, win)
    n = b * c * n_frames
    return jnp.pad(frames, ((0, n_pad - n), (0, 0)))


# ------------------------------ Pallas kernel ------------------------------

def _mel_l1_kernel(fxy_ref, cs_ref, mel_ref, mag_ref, log_ref, melbuf,
                   *, clamp_eps, pow_, f_pad, tile_n):
    # One DFT matmul for the stacked x|y frame tile (M = 2*tile_n), bf16
    # operands, f32 accumulation.  The Hann window is folded into cs.
    d = jnp.dot(fxy_ref[...], cs_ref[...], preferred_element_type=jnp.float32)
    re = d[:, :f_pad]
    im = d[:, f_pad:]
    mag = jnp.sqrt(re * re + im * im)

    # One mel projection; the result is parked in a VMEM scratch so the
    # epilogue can stream it in 8-row chunks (small vreg live-set, no spills).
    # TODO(synk): keep this LHS in f32 on v5e/v6e if tighter accuracy is
    # needed near the clamp_eps floor (VMEM is plentiful there).
    melbuf[...] = jnp.dot(mag.astype(jnp.bfloat16), mel_ref[...],
                          preferred_element_type=jnp.float32)

    m_pad = melbuf.shape[1]
    zeros = jnp.zeros((8, m_pad), jnp.float32)

    def body(k, carry):
        acc_mag, acc_log = carry
        ox = pl.multiple_of(k * 8, 8)             # x rows of this tile
        oy = pl.multiple_of(k * 8 + tile_n, 8)    # matching y rows
        mx = melbuf[pl.ds(ox, 8), :]
        my = melbuf[pl.ds(oy, 8), :]
        lx = jnp.log10(jnp.maximum(mx, clamp_eps))
        ly = jnp.log10(jnp.maximum(my, clamp_eps))
        return acc_mag + jnp.abs(mx - my), acc_log + jnp.abs(lx - ly)

    acc_mag, acc_log = lax.fori_loop(0, tile_n // 8, body, (zeros, zeros),
                                     unroll=True)
    mag_ref[...] = acc_mag
    # clamp(eps).pow(p).log10() == p*log10(max(., eps)); |p*a - p*b| = |p|*|a-b|
    log_ref[...] = abs(pow_) * acc_log


def _scale_loss_pallas(fx, fy, cs_b, mel_b, f_pad, count, clamp_eps, pow_,
                       tile_n):
    n_pad, w = fx.shape
    m_pad = mel_b.shape[1]
    assert n_pad % tile_n == 0 and tile_n % 8 == 0
    n_tiles = n_pad // tile_n

    # Interleave x/y frame tiles along rows: block i holds tile_n x-frames
    # followed by tile_n y-frames, so each grid step runs ONE DFT matmul and
    # ONE mel matmul with M = 2*tile_n.
    fxy = jnp.concatenate(
        [fx.reshape(n_tiles, tile_n, w), fy.reshape(n_tiles, tile_n, w)],
        axis=1).reshape(n_tiles * 2 * tile_n, w)

    kernel = functools.partial(_mel_l1_kernel, clamp_eps=float(clamp_eps),
                               pow_=float(pow_), f_pad=f_pad, tile_n=tile_n)

    flops = int(2 * (2 * n_pad) * w * (2 * f_pad)       # DFT (x and y stacked)
                + 2 * (2 * n_pad) * f_pad * m_pad)      # mel projection
    transcendentals = int(2 * n_pad * (f_pad + m_pad))  # sqrt + log10
    bytes_accessed = int(2 * n_pad * w * 2 + w * 2 * f_pad * 2
                         + f_pad * m_pad * 2 + 2 * n_tiles * 8 * m_pad * 4)

    mag_part, log_part = pl.pallas_call(
        kernel,
        out_shape=(jax.ShapeDtypeStruct((n_tiles * 8, m_pad), jnp.float32),
                   jax.ShapeDtypeStruct((n_tiles * 8, m_pad), jnp.float32)),
        grid=(n_tiles,),
        in_specs=[
            # x|y frames of tile i (pipelined / double-buffered).
            pl.BlockSpec((2 * tile_n, w), lambda i: (i, 0)),
            # Grid-invariant operands: whole array resident in VMEM, one copy,
            # no per-step DMA and no double-buffering.
            pl.BlockSpec(memory_space=pltpu.MemorySpace.VMEM),  # DFT (re|im)
            pl.BlockSpec(memory_space=pltpu.MemorySpace.VMEM),  # mel filterbank
        ],
        out_specs=(pl.BlockSpec((8, m_pad), lambda i: (i, 0)),
                   pl.BlockSpec((8, m_pad), lambda i: (i, 0))),
        scratch_shapes=[pltpu.VMEM((2 * tile_n, m_pad), jnp.float32)],
        compiler_params=pltpu.CompilerParams(
            dimension_semantics=("parallel",),   # independent tiles -> megacore
            vmem_limit_bytes=48 * 1024 * 1024,   # <= v7x 64 MiB physical VMEM
        ),
        cost_estimate=pl.CostEstimate(flops=flops,
                                      transcendentals=transcendentals,
                                      bytes_accessed=bytes_accessed),
    )(fxy, cs_b, mel_b)

    return jnp.sum(mag_part) / count, jnp.sum(log_part) / count


def _scale_loss_ref(fx, fy, cs, mel_fb, f_pad, count, clamp_eps, pow_):
    # Pure-JAX f32 reference of the kernel math (same prepared matrices).
    def mel_of(fr):
        d = fr.astype(jnp.float32) @ cs
        re, im = d[:, :f_pad], d[:, f_pad:]
        return jnp.sqrt(re * re + im * im) @ mel_fb

    mx, my = mel_of(fx), mel_of(fy)
    mag_mean = jnp.sum(jnp.abs(mx - my)) / count
    lx = pow_ * jnp.log10(jnp.maximum(mx, clamp_eps))
    ly = pow_ * jnp.log10(jnp.maximum(my, clamp_eps))
    log_mean = jnp.sum(jnp.abs(lx - ly)) / count
    return mag_mean, log_mean


# ------------------------------- module shim -------------------------------

class MelSpectrogramLoss:
    """Multi-scale mel-spectrogram L1 loss (Pallas TPU implementation)."""

    def __init__(self, n_mels=(150, 80), window_lengths=(2048, 512),
                 clamp_eps=1e-5, mag_weight=1.0, log_weight=1.0, pow=2.0,
                 weight=1.0, match_stride=False, mel_fmin=(0.0, 0.0),
                 mel_fmax=(None, None), window_type="hann",
                 sample_rate=16000, frame_tile=256):
        # TODO(synk): match_stride=True, non-'hann' windows and loss_fns other
        # than L1 with 'mean' reduction are not implemented (module defaults).
        self.clamp_eps = float(clamp_eps)
        self.mag_weight = float(mag_weight)
        self.log_weight = float(log_weight)
        self.pow = float(pow)
        self.weight = float(weight)          # stored for parity; not applied
        self.frame_tile = int(frame_tile)    # 256; auto-drops for small grids
        self.scales = []
        for nm, fmin, fmax, win in zip(n_mels, mel_fmin, mel_fmax,
                                       window_lengths):
            hop = win // 4
            f = win // 2 + 1
            f_pad = _round_up(f, 128)
            m_pad = _round_up(nm, 128)
            window = _hann_window(win)
            cos_m, sin_m = _dft_matrices(win)
            cs = np.zeros((win, 2 * f_pad), np.float32)   # [W, 2*F_pad]: re|im
            cs[:, :f] = window[:, None] * cos_m
            cs[:, f_pad:f_pad + f] = window[:, None] * sin_m
            mel = np.zeros((f_pad, m_pad), np.float32)
            mel[:f, :nm] = _mel_filterbank(nm, win, sample_rate, fmin, fmax)
            # Constants uploaded once here (not per call).
            self.scales.append(dict(
                win=win, hop=hop, n_mels=nm, f_pad=f_pad, m_pad=m_pad,
                cs_f32=jnp.asarray(cs), mel_f32=jnp.asarray(mel),
                cs_bf16=jnp.asarray(cs).astype(jnp.bfloat16),
                mel_bf16=jnp.asarray(mel).astype(jnp.bfloat16)))

    def _per_scale(self, x, y, use_pallas):
        b, c, t = x.shape
        terms = []
        for s in self.scales:
            win, hop = s["win"], s["hop"]
            n = b * c * _num_frames(t, win, hop)
            tile_n = _pick_tile_n(n, self.frame_tile)
            n_pad = _round_up(n, tile_n)
            fx = _frames_bf16(x, win, hop, n_pad)
            fy = _frames_bf16(y, win, hop, n_pad)
            count = float(n * s["n_mels"])         # L1 'mean' denominator
            if use_pallas:
                terms.append(_scale_loss_pallas(
                    fx, fy, s["cs_bf16"], s["mel_bf16"], s["f_pad"], count,
                    self.clamp_eps, self.pow, tile_n))
            else:
                terms.append(_scale_loss_ref(
                    fx, fy, s["cs_f32"], s["mel_f32"], s["f_pad"], count,
                    self.clamp_eps, self.pow))
        return terms

    def __call__(self, x, y):
        loss = jnp.float32(0.0)
        for mag_mean, log_mean in self._per_scale(x, y, use_pallas=True):
            loss = loss + self.log_weight * log_mean + self.mag_weight * mag_mean
        return loss

    def reference(self, x, y):
        loss = jnp.float32(0.0)
        for mag_mean, log_mean in self._per_scale(x, y, use_pallas=False):
            loss = loss + self.log_weight * log_mean + self.mag_weight * mag_mean
        return loss


# ----------------------------------- main -----------------------------------

if __name__ == "__main__":
    key = jax.random.PRNGKey(0)
    kx, ky = jax.random.split(key)
    B, C, T = 2, 1, 2048                       # small stand-in for [B,1,16758]
    x = 0.1 * jax.random.normal(kx, (B, C, T), jnp.float32)
    y = 0.1 * jax.random.normal(ky, (B, C, T), jnp.float32)

    # Small multi-scale config (constructor params of the module).
    loss_mod = MelSpectrogramLoss(n_mels=(80, 40), window_lengths=(512, 128),
                                  mel_fmin=(0.0, 0.0), mel_fmax=(None, None))

    loss = jax.block_until_ready(loss_mod(x, y))
    ref = jax.block_until_ready(loss_mod.reference(x, y))

    assert np.isfinite(float(loss)), "non-finite loss"
    # bf16 matmul operands vs the f32 reference: small expected deviation.
    np.testing.assert_allclose(float(loss), float(ref), rtol=4e-2, atol=5e-3)
    print("KERNEL_OK")
</pallas_src>

<mosaic_0001>
module attributes {stable_mosaic.version = 11 : i64} {
  func.func @_mel_l1_kernel(%arg0: i32, %arg1: memref<80x512xbf16, #tpu.memory_space<vmem>>, %arg2: memref<512x768xbf16, #tpu.memory_space<vmem>>, %arg3: memref<384x128xbf16, #tpu.memory_space<vmem>>, %arg4: memref<8x128xf32, #tpu.memory_space<vmem>>, %arg5: memref<8x128xf32, #tpu.memory_space<vmem>>, %arg6: memref<80x128xf32, #tpu.memory_space<vmem>>) attributes {dimension_semantics = [#tpu.dimension_semantics<parallel>], iteration_bounds = array<i64: 1>, scalar_prefetch = 0 : i64, scratch_operands = 1 : i64, tpu.core_type = #tpu.core_type<tc>, window_params = [{transform_indices = @transform_0, window_bounds = array<i64: 80, 512>}, {pipeline_mode = #tpu.pipeline_mode<synchronous>, transform_indices = @transform_1, window_bounds = array<i64: 512, 768>}, {pipeline_mode = #tpu.pipeline_mode<synchronous>, transform_indices = @transform_2, window_bounds = array<i64: 384, 128>}, {transform_indices = @transform_3, window_bounds = array<i64: 8, 128>}, {transform_indices = @transform_4, window_bounds = array<i64: 8, 128>}]} {
    %c0 = arith.constant 0 : index
    %c0_0 = arith.constant 0 : index
    %0 = vector.load %arg1[%c0, %c0_0] : memref<80x512xbf16, #tpu.memory_space<vmem>>, vector<80x512xbf16>
    %c0_1 = arith.constant 0 : index
    %c0_2 = arith.constant 0 : index
    %1 = vector.load %arg2[%c0_1, %c0_2] : memref<512x768xbf16, #tpu.memory_space<vmem>>, vector<512x768xbf16>
    %cst = arith.constant dense<0.000000e+00> : vector<80x768xf32>
    %2 = tpu.matmul %0, %1, %cst {dimension_numbers = #tpu.dot_dimension_numbers<[1], [0], [0], [1], [0, 0, 1, 1], [], []>} : vector<80x512xbf16>, vector<512x768xbf16>, vector<80x768xf32> -> vector<80x768xf32>
    %3 = vector.extract_strided_slice %2 {offsets = [0, 0], sizes = [80, 384], strides = [1, 1]} : vector<80x768xf32> to vector<80x384xf32>
    %4 = vector.extract_strided_slice %2 {offsets = [0, 384], sizes = [80, 384], strides = [1, 1]} : vector<80x768xf32> to vector<80x384xf32>
    %5 = arith.mulf %3, %3 : vector<80x384xf32>
    %6 = arith.mulf %4, %4 : vector<80x384xf32>
    %7 = arith.addf %5, %6 : vector<80x384xf32>
    %8 = math.sqrt %7 : vector<80x384xf32>
    %9 = arith.truncf %8 : vector<80x384xf32> to vector<80x384xbf16>
    %c0_3 = arith.constant 0 : index
    %c0_4 = arith.constant 0 : index
    %10 = vector.load %arg3[%c0_3, %c0_4] : memref<384x128xbf16, #tpu.memory_space<vmem>>, vector<384x128xbf16>
    %cst_5 = arith.constant dense<0.000000e+00> : vector<80x128xf32>
    %11 = tpu.matmul %9, %10, %cst_5 {dimension_numbers = #tpu.dot_dimension_numbers<[1], [0], [0], [1], [0, 0, 1, 1], [], []>} : vector<80x384xbf16>, vector<384x128xbf16>, vector<80x128xf32> -> vector<80x128xf32>
    %c0_6 = arith.constant 0 : index
    %c0_7 = arith.constant 0 : index
    %12 = vector.load %arg6[%c0_6, %c0_7] : memref<80x128xf32, #tpu.memory_space<vmem>>, vector<80x128xf32>
    tpu.vector_store %arg6[%c0_6, %c0_7], %11 {strides = array<i32>} : memref<80x128xf32, #tpu.memory_space<vmem>>, vector<80x128xf32>,
    %cst_8 = arith.constant 0.000000e+00 : f32
    %13 = vector.broadcast %cst_8 : f32 to vector<8x128xf32>
    %c0_i32 = arith.constant 0 : i32
    %c8_i32 = arith.constant 8 : i32
    %14 = arith.muli %c0_i32, %c8_i32 : i32
    %15 = tpu.assume_multiple %14, 8 : i32
    %c8_i32_9 = arith.constant 8 : i32
    %16 = arith.muli %c0_i32, %c8_i32_9 : i32
    %c40_i32 = arith.constant 40 : i32
    %17 = arith.addi %16, %c40_i32 : i32
    %18 = tpu.assume_multiple %17, 8 : i32
    %19 = arith.index_cast %15 : i32 to index
    %c0_10 = arith.constant 0 : index
    %20 = vector.load %arg6[%19, %c0_10] : memref<80x128xf32, #tpu.memory_space<vmem>>, vector<8x128xf32>
    %21 = arith.index_cast %18 : i32 to index
    %c0_11 = arith.constant 0 : index
    %22 = vector.load %arg6[%21, %c0_11] : memref<80x128xf32, #tpu.memory_space<vmem>>, vector<8x128xf32>
    %cst_12 = arith.constant 9.99999974E-6 : f32
    %23 = vector.broadcast %cst_12 : f32 to vector<8x128xf32>
    %24 = arith.maximumf %20, %23 : vector<8x128xf32>
    %25 = math.log %24 : vector<8x128xf32>
    %cst_13 = arith.constant 0.434294492 : f32
    %26 = vector.broadcast %cst_13 : f32 to vector<8x128xf32>
    %27 = arith.mulf %25, %26 : vector<8x128xf32>
    %cst_14 = arith.constant 9.99999974E-6 : f32
    %28 = vector.broadcast %cst_14 : f32 to vector<8x128xf32>
    %29 = arith.maximumf %22, %28 : vector<8x128xf32>
    %30 = math.log %29 : vector<8x128xf32>
    %cst_15 = arith.constant 0.434294492 : f32
    %31 = vector.broadcast %cst_15 : f32 to vector<8x128xf32>
    %32 = arith.mulf %30, %31 : vector<8x128xf32>
    %33 = arith.subf %20, %22 : vector<8x128xf32>
    %34 = math.absf %33 : vector<8x128xf32>
    %35 = arith.addf %13, %34 : vector<8x128xf32>
    %36 = arith.subf %27, %32 : vector<8x128xf32>
    %37 = math.absf %36 : vector<8x128xf32>
    %38 = arith.addf %13, %37 : vector<8x128xf32>
    %c1_i32 = arith.constant 1 : i32
    %c8_i32_16 = arith.constant 8 : i32
    %39 = arith.muli %c1_i32, %c8_i32_16 : i32
    %40 = tpu.assume_multiple %39, 8 : i32
    %c8_i32_17 = arith.constant 8 : i32
    %41 = arith.muli %c1_i32, %c8_i32_17 : i32
    %c40_i32_18 = arith.constant 40 : i32
    %42 = arith.addi %41, %c40_i32_18 : i32
    %43 = tpu.assume_multiple %42, 8 : i32
    %44 = arith.index_cast %40 : i32 to index
    %c0_19 = arith.constant 0 : index
    %45 = vector.load %arg6[%44, %c0_19] : memref<80x128xf32, #tpu.memory_space<vmem>>, vector<8x128xf32>
    %46 = arith.index_cast %43 : i32 to index
    %c0_20 = arith.constant 0 : index
    %47 = vector.load %arg6[%46, %c0_20] : memref<80x128xf32, #tpu.memory_space<vmem>>, vector<8x128xf32>
    %cst_21 = arith.constant 9.99999974E-6 : f32
    %48 = vector.broadcast %cst_21 : f32 to vector<8x128xf32>
    %49 = arith.maximumf %45, %48 : vector<8x128xf32>
    %50 = math.log %49 : vector<8x128xf32>
    %cst_22 = arith.constant 0.434294492 : f32
    %51 = vector.broadcast %cst_22 : f32 to vector<8x128xf32>
    %52 = arith.mulf %50, %51 : vector<8x128xf32>
    %cst_23 = arith.constant 9.99999974E-6 : f32
    %53 = vector.broadcast %cst_23 : f32 to vector<8x128xf32>
    %54 = arith.maximumf %47, %53 : vector<8x128xf32>
    %55 = math.log %54 : vector<8x128xf32>
    %cst_24 = arith.constant 0.434294492 : f32
    %56 = vector.broadcast %cst_24 : f32 to vector<8x128xf32>
    %57 = arith.mulf %55, %56 : vector<8x128xf32>
    %58 = arith.subf %45, %47 : vector<8x128xf32>
    %59 = math.absf %58 : vector<8x128xf32>
    %60 = arith.addf %35, %59 : vector<8x128xf32>
    %61 = arith.subf %52, %57 : vector<8x128xf32>
    %62 = math.absf %61 : vector<8x128xf32>
    %63 = arith.addf %38, %62 : vector<8x128xf32>
    %c2_i32 = arith.constant 2 : i32
    %c8_i32_25 = arith.constant 8 : i32
    %64 = arith.muli %c2_i32, %c8_i32_25 : i32
    %65 = tpu.assume_multiple %64, 8 : i32
    %c8_i32_26 = arith.constant 8 : i32
    %66 = arith.muli %c2_i32, %c8_i32_26 : i32
    %c40_i32_27 = arith.constant 40 : i32
    %67 = arith.addi %66, %c40_i32_27 : i32
    %68 = tpu.assume_multiple %67, 8 : i32
    %69 = arith.index_cast %65 : i32 to index
    %c0_28 = arith.constant 0 : index
    %70 = vector.load %arg6[%69, %c0_28] : memref<80x128xf32, #tpu.memory_space<vmem>>, vector<8x128xf32>
    %71 = arith.index_cast %68 : i32 to index
    %c0_29 = arith.constant 0 : index
    %72 = vector.load %arg6[%71, %c0_29] : memref<80x128xf32, #tpu.memory_space<vmem>>, vector<8x128xf32>
    %cst_30 = arith.constant 9.99999974E-6 : f32
    %73 = vector.broadcast %cst_30 : f32 to vector<8x128xf32>
    %74 = arith.maximumf %70, %73 : vector<8x128xf32>
    %75 = math.log %74 : vector<8x128xf32>
    %cst_31 = arith.constant 0.434294492 : f32
    %76 = vector.broadcast %cst_31 : f32 to vector<8x128xf32>
    %77 = arith.mulf %75, %76 : vector<8x128xf32>
    %cst_32 = arith.constant 9.99999974E-6 : f32
    %78 = vector.broadcast %cst_32 : f32 to vector<8x128xf32>
    %79 = arith.maximumf %72, %78 : vector<8x128xf32>
    %80 = math.log %79 : vector<8x128xf32>
    %cst_33 = arith.constant 0.434294492 : f32
    %81 = vector.broadcast %cst_33 : f32 to vector<8x128xf32>
    %82 = arith.mulf %80, %81 : vector<8x128xf32>
    %83 = arith.subf %70, %72 : vector<8x128xf32>
    %84 = math.absf %83 : vector<8x128xf32>
    %85 = arith.addf %60, %84 : vector<8x128xf32>
    %86 = arith.subf %77, %82 : vector<8x128xf32>
    %87 = math.absf %86 : vector<8x128xf32>
    %88 = arith.addf %63, %87 : vector<8x128xf32>
    %c3_i32 = arith.constant 3 : i32
    %c8_i32_34 = arith.constant 8 : i32
    %89 = arith.muli %c3_i32, %c8_i32_34 : i32
    %90 = tpu.assume_multiple %89, 8 : i32
    %c8_i32_35 = arith.constant 8 : i32
    %91 = arith.muli %c3_i32, %c8_i32_35 : i32
    %c40_i32_36 = arith.constant 40 : i32
    %92 = arith.addi %91, %c40_i32_36 : i32
    %93 = tpu.assume_multiple %92, 8 : i32
    %94 = arith.index_cast %90 : i32 to index
    %c0_37 = arith.constant 0 : index
    %95 = vector.load %arg6[%94, %c0_37] : memref<80x128xf32, #tpu.memory_space<vmem>>, vector<8x128xf32>
    %96 = arith.index_cast %93 : i32 to index
    %c0_38 = arith.constant 0 : index
    %97 = vector.load %arg6[%96, %c0_38] : memref<80x128xf32, #tpu.memory_space<vmem>>, vector<8x128xf32>
    %cst_39 = arith.constant 9.99999974E-6 : f32
    %98 = vector.broadcast %cst_39 : f32 to vector<8x128xf32>
    %99 = arith.maximumf %95, %98 : vector<8x128xf32>
    %100 = math.log %99 : vector<8x128xf32>
    %cst_40 = arith.constant 0.434294492 : f32
    %101 = vector.broadcast %cst_40 : f32 to vector<8x128xf32>
    %102 = arith.mulf %100, %101 : vector<8x128xf32>
    %cst_41 = arith.constant 9.99999974E-6 : f32
    %103 = vector.broadcast %cst_41 : f32 to vector<8x128xf32>
    %104 = arith.maximumf %97, %103 : vector<8x128xf32>
    %105 = math.log %104 : vector<8x128xf32>
    %cst_42 = arith.constant 0.434294492 : f32
    %106 = vector.broadcast %cst_42 : f32 to vector<8x128xf32>
    %107 = arith.mulf %105, %106 : vector<8x128xf32>
    %108 = arith.subf %95, %97 : vector<8x128xf32>
    %109 = math.absf %108 : vector<8x128xf32>
    %110 = arith.addf %85, %109 : vector<8x128xf32>
    %111 = arith.subf %102, %107 : vector<8x128xf32>
    %112 = math.absf %111 : vector<8x128xf32>
    %113 = arith.addf %88, %112 : vector<8x128xf32>
    %c4_i32 = arith.constant 4 : i32
    %c8_i32_43 = arith.constant 8 : i32
    %114 = arith.muli %c4_i32, %c8_i32_43 : i32
    %115 = tpu.assume_multiple %114, 8 : i32
    %c8_i32_44 = arith.constant 8 : i32
    %116 = arith.muli %c4_i32, %c8_i32_44 : i32
    %c40_i32_45 = arith.constant 40 : i32
    %117 = arith.addi %116, %c40_i32_45 : i32
    %118 = tpu.assume_multiple %117, 8 : i32
    %119 = arith.index_cast %115 : i32 to index
    %c0_46 = arith.constant 0 : index
    %120 = vector.load %arg6[%119, %c0_46] : memref<80x128xf32, #tpu.memory_space<vmem>>, vector<8x128xf32>
    %121 = arith.index_cast %118 : i32 to index
    %c0_47 = arith.constant 0 : index
    %122 = vector.load %arg6[%121, %c0_47] : memref<80x128xf32, #tpu.memory_space<vmem>>, vector<8x128xf32>
    %cst_48 = arith.constant 9.99999974E-6 : f32
    %123 = vector.broadcast %cst_48 : f32 to vector<8x128xf32>
    %124 = arith.maximumf %120, %123 : vector<8x128xf32>
    %125 = math.log %124 : vector<8x128xf32>
    %cst_49 = arith.constant 0.434294492 : f32
    %126 = vector.broadcast %cst_49 : f32 to vector<8x128xf32>
    %127 = arith.mulf %125, %126 : vector<8x128xf32>
    %cst_50 = arith.constant 9.99999974E-6 : f32
    %128 = vector.broadcast %cst_50 : f32 to vector<8x128xf32>
    %129 = arith.maximumf %122, %128 : vector<8x128xf32>
    %130 = math.log %129 : vector<8x128xf32>
    %cst_51 = arith.constant 0.434294492 : f32
    %131 = vector.broadcast %cst_51 : f32 to vector<8x128xf32>
    %132 = arith.mulf %130, %131 : vector<8x128xf32>
    %133 = arith.subf %120, %122 : vector<8x128xf32>
    %134 = math.absf %133 : vector<8x128xf32>
    %135 = arith.addf %110, %134 : vector<8x128xf32>
    %136 = arith.subf %127, %132 : vector<8x128xf32>
    %137 = math.absf %136 : vector<8x128xf32>
    %138 = arith.addf %113, %137 : vector<8x128xf32>
    %c5_i32 = arith.constant 5 : i32
    %c0_52 = arith.constant 0 : index
    %c0_53 = arith.constant 0 : index
    %139 = vector.load %arg4[%c0_52, %c0_53] : memref<8x128xf32, #tpu.memory_space<vmem>>, vector<8x128xf32>
    tpu.vector_store %arg4[%c0_52, %c0_53], %135 {strides = array<i32>} : memref<8x128xf32, #tpu.memory_space<vmem>>, vector<8x128xf32>,
    %cst_54 = arith.constant 2.000000e+00 : f32
    %140 = vector.broadcast %cst_54 : f32 to vector<8x128xf32>
    %141 = arith.mulf %140, %138 : vector<8x128xf32>
    %c0_55 = arith.constant 0 : index
    %c0_56 = arith.constant 0 : index
    %142 = vector.load %arg5[%c0_55, %c0_56] : memref<8x128xf32, #tpu.memory_space<vmem>>, vector<8x128xf32>
    tpu.vector_store %arg5[%c0_55, %c0_56], %141 {strides = array<i32>} : memref<8x128xf32, #tpu.memory_space<vmem>>, vector<8x128xf32>,
    return
  }
  func.func @transform_0(%arg0: i32) -> (i32, i32) {
    %c0_i32 = arith.constant 0 : i32
    %c0_i32_0 = arith.constant 0 : i32
    return %arg0, %c0_i32 : i32, i32
  }
  func.func @transform_1(%arg0: i32) -> (i32, i32) {
    %c0_i32 = arith.constant 0 : i32
    %c0_i32_0 = arith.constant 0 : i32
    %c0_i32_1 = arith.constant 0 : i32
    return %c0_i32, %c0_i32_0 : i32, i32
  }
  func.func @transform_2(%arg0: i32) -> (i32, i32) {
    %c0_i32 = arith.constant 0 : i32
    %c0_i32_0 = arith.constant 0 : i32
    %c0_i32_1 = arith.constant 0 : i32
    return %c0_i32, %c0_i32_0 : i32, i32
  }
  func.func @transform_3(%arg0: i32) -> (i32, i32) {
    %c0_i32 = arith.constant 0 : i32
    %c0_i32_0 = arith.constant 0 : i32
    return %arg0, %c0_i32 : i32, i32
  }
  func.func @transform_4(%arg0: i32) -> (i32, i32) {
    %c0_i32 = arith.constant 0 : i32
    %c0_i32_0 = arith.constant 0 : i32
    return %arg0, %c0_i32 : i32, i32
  }
}

</mosaic_0001>

<llo_original>
// kernel: tpu_custom_call.1
$region0: #{tpu_custom_call.1}
  #allocation0 [shape = 'u32[]', space=smem, size = 0x4, offset = 0x4, fixed_abs, tag = 'smem constant byte address 0x4 - core index']
  #allocation1 [shape = 'u32[72,128]{1,0:T(1,128)}', space=vmem, size = 0x9000, scoped, tag = 'internal scratch']
  #allocation2 [shape = 'f32[80,128]{1,0:T(8,128)}', space=vmem, size = 0xa000, scoped, tag = 'scratch operand']
  %s0 = inlined_call_operand.hbm [shape: bf16[80,512], index: 0, kind: input, shape index: {}]
  %s1 = inlined_call_operand.hbm [shape: bf16[512,768], index: 1, kind: input, shape index: {}]
  %s2 = inlined_call_operand.hbm [shape: bf16[384,128], index: 2, kind: input, shape index: {}]
  %s3 = inlined_call_operand.hbm [shape: f32[8,128], index: 3, kind: output, shape index: {0}]
  %s4 = inlined_call_operand.hbm [shape: f32[8,128], index: 4, kind: output, shape index: {1}]
  %5 = xla_tuple %s3, %s4
  %s6 = sld [smem:[#allocation0]]
  $region42: #{tpu_custom_call.1} parent=0
    _
  %s8 = ssub.s32 1, %s6
  %s9 = scalar_select 0, %s8, %s6
  $region1: #{tpu_custom_call.1} parent=0
    #allocation3 [shape = 'u8[81920]{0}', space=vmem, size = 0x14000, scoped, tag = 'input window, operand 0, single buffered']
    #allocation4 [shape = 's32[1]{0}', space=sflag, size = 0x4, scoped, tag = 'scoped memory for tpu_custom_call.1']
    #allocation5 [shape = 's32[1]{0}', space=sflag, size = 0x4, scoped, tag = 'scoped memory for tpu_custom_call.1']
    #allocation6 [shape = 'u8[786432]{0}', space=vmem, size = 0xc0000, scoped, tag = 'input window, operand 1, single buffered']
    #allocation7 [shape = 's32[1]{0}', space=sflag, size = 0x4, scoped, tag = 'scoped memory for tpu_custom_call.1']
    #allocation8 [shape = 'u8[98304]{0}', space=vmem, size = 0x18000, scoped, tag = 'input window, operand 2, single buffered']
    #allocation9 [shape = 'u8[4096]{0}', space=vmem, size = 0x1000, scoped, tag = 'output window, operand 0, single buffered']
    #allocation10 [shape = 'u8[4096]{0}', space=vmem, size = 0x1000, scoped, tag = 'output window, operand 1, single buffered']
    #allocation11 [shape = 's32[1]{0}', space=sflag, size = 0x4, scoped, tag = 'scoped memory for tpu_custom_call.1']
    %10 = vsyncpa [#allocation4], 0
    %11 = vsyncpa [#allocation7], 0
    %12 = vsyncpa [#allocation5], 0
    %13 = vsyncpa [#allocation11], 0
    // Predicated region
    $region2: #{tpu_custom_call.1} parent=1 // pred_check
      _
    $region3: #{tpu_custom_call.1} parent=1 // pred_check_branch
      %15 = sbr.rel (0) target = $region5
    $region4: #{tpu_custom_call.1} parent=1 // pred_region
      %17 = vsyncadd [#allocation4], 0
      %s18 = sshll.u32 %s0, 4
      %s19 = int_to_ptr.hbm [resolvable:$true] %s18
      %s20 = sshll.u32 [#allocation3], 4
      %s21 = int_to_ptr.vmem [resolvable:$true] %s20
      %26 = dma.hbm_to_vmem [thread:$0]  %s19, 2560, %s21, [#allocation4], 256, 256, 16
    $region5: #{tpu_custom_call.1} parent=1 // pred_fallthru
      _
    // Predicated region
    $region6: #{tpu_custom_call.1} parent=1 // pred_check
      _
    $region7: #{tpu_custom_call.1} parent=1 // pred_check_branch
      %28 = sbr.rel (0) target = $region9
    $region8: #{tpu_custom_call.1} parent=1 // pred_region
      %30 = vsyncadd [#allocation7], 0
      %s31 = sshll.u32 %s1, 4
      %s32 = int_to_ptr.hbm [resolvable:$true] %s31
      %s33 = sshll.u32 [#allocation6], 4
      %s34 = int_to_ptr.vmem [resolvable:$true] %s33
      %39 = dma.hbm_to_vmem [thread:$0]  %s32, 24576, %s34, [#allocation7], 384, 384, 24
    $region9: #{tpu_custom_call.1} parent=1 // pred_fallthru
      _
    // Predicated region
    $region10: #{tpu_custom_call.1} parent=1 // pred_check
      _
    $region11: #{tpu_custom_call.1} parent=1 // pred_check_branch
      %41 = sbr.rel (0) target = $region13
    $region12: #{tpu_custom_call.1} parent=1 // pred_region
      %43 = vsyncadd [#allocation7], 0
      %s44 = sshll.u32 %s2, 4
      %s45 = int_to_ptr.hbm [resolvable:$true] %s44
      %s46 = sshll.u32 [#allocation8], 4
      %s47 = int_to_ptr.vmem [resolvable:$true] %s46
      %52 = dma.hbm_to_vmem [thread:$0]  %s45, 3072, %s47, [#allocation7], 64, 64, 4
    $region13: #{tpu_custom_call.1} parent=1 // pred_fallthru
      _
    // Predicated region
    $region14: #{tpu_custom_call.1} parent=1 // pred_check
      _
    $region15: #{tpu_custom_call.1} parent=1 // pred_check_branch
      %54 = sbr.rel (0) target = $region17
    $region16: #{tpu_custom_call.1} parent=1 // pred_region
      %56 = dma.done [#allocation4], 2560
    $region17: #{tpu_custom_call.1} parent=1 // pred_fallthru
      _
    // Predicated region
    $region18: #{tpu_custom_call.1} parent=1 // pred_check
      _
    $region19: #{tpu_custom_call.1} parent=1 // pred_check_branch
      %58 = sbr.rel (0) target = $region21
    $region20: #{tpu_custom_call.1} parent=1 // pred_region
      %60 = dma.done [#allocation7], 24576
    $region21: #{tpu_custom_call.1} parent=1 // pred_fallthru
      _
    // Predicated region
    $region22: #{tpu_custom_call.1} parent=1 // pred_check
      _
    $region23: #{tpu_custom_call.1} parent=1 // pred_check_branch
      %62 = sbr.rel (0) target = $region25
    $region24: #{tpu_custom_call.1} parent=1 // pred_region
      %64 = dma.done [#allocation7], 3072
    $region25: #{tpu_custom_call.1} parent=1 // pred_fallthru
      _
    %v65 = vld [vmem:[#allocation3] sm:$0xff]
    %v66 = vld [vmem:[#allocation3 + $0x8] sm:$0xff]
    %v67 = vld [vmem:[#allocation3 + $0x10] sm:$0xff]
    %v68 = vld [vmem:[#allocation3 + $0x18] sm:$0xff]
    %v69 = vld [vmem:[#allocation3 + $0x20] sm:$0xff]
    %v70 = vld [vmem:[#allocation3 + $0x28] sm:$0xff]
    %v71 = vld [vmem:[#allocation3 + $0x30] sm:$0xff]
    %v72 = vld [vmem:[#allocation3 + $0x38] sm:$0xff]
    %v73 = vld [vmem:[#allocation3 + $0x40] sm:$0xff]
    %v74 = vld [vmem:[#allocation3 + $0x48] sm:$0xff]
    %v75 = vld [vmem:[#allocation3 + $0x50] sm:$0xff]
    %v76 = vld [vmem:[#allocation3 + $0x58] sm:$0xff]
    %v77 = vld [vmem:[#allocation3 + $0x60] sm:$0xff]
    %v78 = vld [vmem:[#allocation3 + $0x68] sm:$0xff]
    %v79 = vld [vmem:[#allocation3 + $0x70] sm:$0xff]
    %v80 = vld [vmem:[#allocation3 + $0x78] sm:$0xff]
    %v81 = vld [vmem:[#allocation3 + $0x80] sm:$0xff]
    %v82 = vld [vmem:[#allocation3 + $0x88] sm:$0xff]
    %v83 = vld [vmem:[#allocation3 + $0x90] sm:$0xff]
    %v84 = vld [vmem:[#allocation3 + $0x98] sm:$0xff]
    %v85 = vld [vmem:[#allocation6] sm:$0xff]
    %v86 = vld [vmem:[#allocation6 + $0x8] sm:$0xff]
    %v87 = vld [vmem:[#allocation6 + $0x10] sm:$0xff]
    %v88 = vld [vmem:[#allocation6 + $0x18] sm:$0xff]
    %v89 = vld [vmem:[#allocation6 + $0x20] sm:$0xff]
    %v90 = vld [vmem:[#allocation6 + $0x28] sm:$0xff]
    %v91 = vld [vmem:[#allocation6 + $0x30] sm:$0xff]
    %v92 = vld [vmem:[#allocation6 + $0x38] sm:$0xff]
    %v93 = vld [vmem:[#allocation6 + $0x40] sm:$0xff]
    %v94 = vld [vmem:[#allocation6 + $0x48] sm:$0xff]
    %v95 = vld [vmem:[#allocation6 + $0x50] sm:$0xff]
    %v96 = vld [vmem:[#allocation6 + $0x58] sm:$0xff]
    %v97 = vld [vmem:[#allocation6 + $0x60] sm:$0xff]
    %v98 = vld [vmem:[#allocation6 + $0x68] sm:$0xff]
    %v99 = vld [vmem:[#allocation6 + $0x70] sm:$0xff]
    %v100 = vld [vmem:[#allocation6 + $0x78] sm:$0xff]
    %v101 = vld [vmem:[#allocation6 + $0x80] sm:$0xff]
    %v102 = vld [vmem:[#allocation6 + $0x88] sm:$0xff]
    %v103 = vld [vmem:[#allocation6 + $0x90] sm:$0xff]
    %v104 = vld [vmem:[#allocation6 + $0x98] sm:$0xff]
    %v105 = vld [vmem:[#allocation6 + $0xa0] sm:$0xff]
    %v106 = vld [vmem:[#allocation6 + $0xa8] sm:$0xff]
    %v107 = vld [vmem:[#allocation6 + $0xb0] sm:$0xff]
    %v108 = vld [vmem:[#allocation6 + $0xb8] sm:$0xff]
    %v109 = vld [vmem:[#allocation6 + $0xc0] sm:$0xff]
    %v110 = vld [vmem:[#allocation6 + $0xc8] sm:$0xff]
    %v111 = vld [vmem:[#allocation6 + $0xd0] sm:$0xff]
    %v112 = vld [vmem:[#allocation6 + $0xd8] sm:$0xff]
    %v113 = vld [vmem:[#allocation6 + $0xe0] sm:$0xff]
    %v114 = vld [vmem:[#allocation6 + $0xe8] sm:$0xff]
    %v115 = vld [vmem:[#allocation6 + $0xf0] sm:$0xff]
    %v116 = vld [vmem:[#allocation6 + $0xf8] sm:$0xff]
    %v117 = vld [vmem:[#allocation6 + $0x100] sm:$0xff]
    %v118 = vld [vmem:[#allocation6 + $0x108] sm:$0xff]
    %v119 = vld [vmem:[#allocation6 + $0x110] sm:$0xff]
    %v120 = vld [vmem:[#allocation6 + $0x118] sm:$0xff]
    %v121 = vld [vmem:[#allocation6 + $0x120] sm:$0xff]
    %v122 = vld [vmem:[#allocation6 + $0x128] sm:$0xff]
    %v123 = vld [vmem:[#allocation6 + $0x130] sm:$0xff]
    %v124 = vld [vmem:[#allocation6 + $0x138] sm:$0xff]
    %v125 = vld [vmem:[#allocation6 + $0x140] sm:$0xff]
    %v126 = vld [vmem:[#allocation6 + $0x148] sm:$0xff]
    %v127 = vld [vmem:[#allocation6 + $0x150] sm:$0xff]
    %v128 = vld [vmem:[#allocation6 + $0x158] sm:$0xff]
    %v129 = vld [vmem:[#allocation6 + $0x160] sm:$0xff]
    %v130 = vld [vmem:[#allocation6 + $0x168] sm:$0xff]
    %v131 = vld [vmem:[#allocation6 + $0x170] sm:$0xff]
    %v132 = vld [vmem:[#allocation6 + $0x178] sm:$0xff]
    %v133 = vld [vmem:[#allocation6 + $0x180] sm:$0xff]
    %v134 = vld [vmem:[#allocation6 + $0x188] sm:$0xff]
    %v135 = vld [vmem:[#allocation6 + $0x190] sm:$0xff]
    %v136 = vld [vmem:[#allocation6 + $0x198] sm:$0xff]
    %v137 = vld [vmem:[#allocation6 + $0x1a0] sm:$0xff]
    %v138 = vld [vmem:[#allocation6 + $0x1a8] sm:$0xff]
    %v139 = vld [vmem:[#allocation6 + $0x1b0] sm:$0xff]
    %v140 = vld [vmem:[#allocation6 + $0x1b8] sm:$0xff]
    %v141 = vld [vmem:[#allocation6 + $0x1c0] sm:$0xff]
    %v142 = vld [vmem:[#allocation6 + $0x1c8] sm:$0xff]
    %v143 = vld [vmem:[#allocation6 + $0x1d0] sm:$0xff]
    %v144 = vld [vmem:[#allocation6 + $0x1d8] sm:$0xff]
    %v145 = vld [vmem:[#allocation6 + $0x1e0] sm:$0xff]
    %v146 = vld [vmem:[#allocation6 + $0x1e8] sm:$0xff]
    %v147 = vld [vmem:[#allocation6 + $0x1f0] sm:$0xff]
    %v148 = vld [vmem:[#allocation6 + $0x1f8] sm:$0xff]
    %v149 = vld [vmem:[#allocation6 + $0x200] sm:$0xff]
    %v150 = vld [vmem:[#allocation6 + $0x208] sm:$0xff]
    %v151 = vld [vmem:[#allocation6 + $0x210] sm:$0xff]
    %v152 = vld [vmem:[#allocation6 + $0x218] sm:$0xff]
    %v153 = vld [vmem:[#allocation6 + $0x220] sm:$0xff]
    %v154 = vld [vmem:[#allocation6 + $0x228] sm:$0xff]
    %v155 = vld [vmem:[#allocation6 + $0x230] sm:$0xff]
    %v156 = vld [vmem:[#allocation6 + $0x238] sm:$0xff]
    %v157 = vld [vmem:[#allocation6 + $0x240] sm:$0xff]
    %v158 = vld [vmem:[#allocation6 + $0x248] sm:$0xff]
    %v159 = vld [vmem:[#allocation6 + $0x250] sm:$0xff]
    %v160 = vld [vmem:[#allocation6 + $0x258] sm:$0xff]
    %v161 = vld [vmem:[#allocation6 + $0x260] sm:$0xff]
    %v162 = vld [vmem:[#allocation6 + $0x268] sm:$0xff]
    %v163 = vld [vmem:[#allocation6 + $0x270] sm:$0xff]
    %v164 = vld [vmem:[#allocation6 + $0x278] sm:$0xff]
    %v165 = vld [vmem:[#allocation6 + $0x280] sm:$0xff]
    %v166 = vld [vmem:[#allocation6 + $0x288] sm:$0xff]
    %v167 = vld [vmem:[#allocation6 + $0x290] sm:$0xff]
    %v168 = vld [vmem:[#allocation6 + $0x298] sm:$0xff]
    %v169 = vld [vmem:[#allocation6 + $0x2a0] sm:$0xff]
    %v170 = vld [vmem:[#allocation6 + $0x2a8] sm:$0xff]
    %v171 = vld [vmem:[#allocation6 + $0x2b0] sm:$0xff]
    %v172 = vld [vmem:[#allocation6 + $0x2b8] sm:$0xff]
    %v173 = vld [vmem:[#allocation6 + $0x2c0] sm:$0xff]
    %v174 = vld [vmem:[#allocation6 + $0x2c8] sm:$0xff]
    %v175 = vld [vmem:[#allocation6 + $0x2d0] sm:$0xff]
    %v176 = vld [vmem:[#allocation6 + $0x2d8] sm:$0xff]
    %v177 = vld [vmem:[#allocation6 + $0x2e0] sm:$0xff]
    %v178 = vld [vmem:[#allocation6 + $0x2e8] sm:$0xff]
    %v179 = vld [vmem:[#allocation6 + $0x2f0] sm:$0xff]
    %v180 = vld [vmem:[#allocation6 + $0x2f8] sm:$0xff]
    %v181 = vld [vmem:[#allocation6 + $0x300] sm:$0xff]
    %v182 = vld [vmem:[#allocation6 + $0x308] sm:$0xff]
    %v183 = vld [vmem:[#allocation6 + $0x310] sm:$0xff]
    %v184 = vld [vmem:[#allocation6 + $0x318] sm:$0xff]
    %v185 = vld [vmem:[#allocation6 + $0x320] sm:$0xff]
    %v186 = vld [vmem:[#allocation6 + $0x328] sm:$0xff]
    %v187 = vld [vmem:[#allocation6 + $0x330] sm:$0xff]
    %v188 = vld [vmem:[#allocation6 + $0x338] sm:$0xff]
    %v189 = vld [vmem:[#allocation6 + $0x340] sm:$0xff]
    %v190 = vld [vmem:[#allocation6 + $0x348] sm:$0xff]
    %v191 = vld [vmem:[#allocation6 + $0x350] sm:$0xff]
    %v192 = vld [vmem:[#allocation6 + $0x358] sm:$0xff]
    %v193 = vld [vmem:[#allocation6 + $0x360] sm:$0xff]
    %v194 = vld [vmem:[#allocation6 + $0x368] sm:$0xff]
    %v195 = vld [vmem:[#allocation6 + $0x370] sm:$0xff]
    %v196 = vld [vmem:[#allocation6 + $0x378] sm:$0xff]
    %v197 = vld [vmem:[#allocation6 + $0x380] sm:$0xff]
    %v198 = vld [vmem:[#allocation6 + $0x388] sm:$0xff]
    %v199 = vld [vmem:[#allocation6 + $0x390] sm:$0xff]
    %v200 = vld [vmem:[#allocation6 + $0x398] sm:$0xff]
    %v201 = vld [vmem:[#allocation6 + $0x3a0] sm:$0xff]
    %v202 = vld [vmem:[#allocation6 + $0x3a8] sm:$0xff]
    %v203 = vld [vmem:[#allocation6 + $0x3b0] sm:$0xff]
    %v204 = vld [vmem:[#allocation6 + $0x3b8] sm:$0xff]
    %v205 = vld [vmem:[#allocation6 + $0x3c0] sm:$0xff]
    %v206 = vld [vmem:[#allocation6 + $0x3c8] sm:$0xff]
    %v207 = vld [vmem:[#allocation6 + $0x3d0] sm:$0xff]
    %v208 = vld [vmem:[#allocation6 + $0x3d8] sm:$0xff]
    %v209 = vld [vmem:[#allocation6 + $0x3e0] sm:$0xff]
    %v210 = vld [vmem:[#allocation6 + $0x3e8] sm:$0xff]
    %v211 = vld [vmem:[#allocation6 + $0x3f0] sm:$0xff]
    %v212 = vld [vmem:[#allocation6 + $0x3f8] sm:$0xff]
    %v213 = vld [vmem:[#allocation6 + $0x400] sm:$0xff]
    %v214 = vld [vmem:[#allocation6 + $0x408] sm:$0xff]
    %v215 = vld [vmem:[#allocation6 + $0x410] sm:$0xff]
    %v216 = vld [vmem:[#allocation6 + $0x418] sm:$0xff]
    %v217 = vld [vmem:[#allocation6 + $0x420] sm:$0xff]
    %v218 = vld [vmem:[#allocation6 + $0x428] sm:$0xff]
    %v219 = vld [vmem:[#allocation6 + $0x430] sm:$0xff]
    %v220 = vld [vmem:[#allocation6 + $0x438] sm:$0xff]
    %v221 = vld [vmem:[#allocation6 + $0x440] sm:$0xff]
    %v222 = vld [vmem:[#allocation6 + $0x448] sm:$0xff]
    %v223 = vld [vmem:[#allocation6 + $0x450] sm:$0xff]
    %v224 = vld [vmem:[#allocation6 + $0x458] sm:$0xff]
    %v225 = vld [vmem:[#allocation6 + $0x460] sm:$0xff]
    %v226 = vld [vmem:[#allocation6 + $0x468] sm:$0xff]
    %v227 = vld [vmem:[#allocation6 + $0x470] sm:$0xff]
    %v228 = vld [vmem:[#allocation6 + $0x478] sm:$0xff]
    %v229 = vld [vmem:[#allocation6 + $0x480] sm:$0xff]
    %v230 = vld [vmem:[#allocation6 + $0x488] sm:$0xff]
    %v231 = vld [vmem:[#allocation6 + $0x490] sm:$0xff]
    %v232 = vld [vmem:[#allocation6 + $0x498] sm:$0xff]
    %v233 = vld [vmem:[#allocation6 + $0x4a0] sm:$0xff]
    %v234 = vld [vmem:[#allocation6 + $0x4a8] sm:$0xff]
    %v235 = vld [vmem:[#allocation6 + $0x4b0] sm:$0xff]
    %v236 = vld [vmem:[#allocation6 + $0x4b8] sm:$0xff]
    %v237 = vld [vmem:[#allocation6 + $0x4c0] sm:$0xff]
    %v238 = vld [vmem:[#allocation6 + $0x4c8] sm:$0xff]
    %v239 = vld [vmem:[#allocation6 + $0x4d0] sm:$0xff]
    %v240 = vld [vmem:[#allocation6 + $0x4d8] sm:$0xff]
    %v241 = vld [vmem:[#allocation6 + $0x4e0] sm:$0xff]
    %v242 = vld [vmem:[#allocation6 + $0x4e8] sm:$0xff]
    %v243 = vld [vmem:[#allocation6 + $0x4f0] sm:$0xff]
    %v244 = vld [vmem:[#allocation6 + $0x4f8] sm:$0xff]
    %v245 = vld [vmem:[#allocation6 + $0x500] sm:$0xff]
    %v246 = vld [vmem:[#allocation6 + $0x508] sm:$0xff]
    %v247 = vld [vmem:[#allocation6 + $0x510] sm:$0xff]
    %v248 = vld [vmem:[#allocation6 + $0x518] sm:$0xff]
    %v249 = vld [vmem:[#allocation6 + $0x520] sm:$0xff]
    %v250 = vld [vmem:[#allocation6 + $0x528] sm:$0xff]
    %v251 = vld [vmem:[#allocation6 + $0x530] sm:$0xff]
    %v252 = vld [vmem:[#allocation6 + $0x538] sm:$0xff]
    %v253 = vld [vmem:[#allocation6 + $0x540] sm:$0xff]
    %v254 = vld [vmem:[#allocation6 + $0x548] sm:$0xff]
    %v255 = vld [vmem:[#allocation6 + $0x550] sm:$0xff]
    %v256 = vld [vmem:[#allocation6 + $0x558] sm:$0xff]
    %v257 = vld [vmem:[#allocation6 + $0x560] sm:$0xff]
    %v258 = vld [vmem:[#allocation6 + $0x568] sm:$0xff]
    %v259 = vld [vmem:[#allocation6 + $0x570] sm:$0xff]
    %v260 = vld [vmem:[#allocation6 + $0x578] sm:$0xff]
    %v261 = vld [vmem:[#allocation6 + $0x580] sm:$0xff]
    %v262 = vld [vmem:[#allocation6 + $0x588] sm:$0xff]
    %v263 = vld [vmem:[#allocation6 + $0x590] sm:$0xff]
    %v264 = vld [vmem:[#allocation6 + $0x598] sm:$0xff]
    %v265 = vld [vmem:[#allocation6 + $0x5a0] sm:$0xff]
    %v266 = vld [vmem:[#allocation6 + $0x5a8] sm:$0xff]
    %v267 = vld [vmem:[#allocation6 + $0x5b0] sm:$0xff]
    %v268 = vld [vmem:[#allocation6 + $0x5b8] sm:$0xff]
    %v269 = vld [vmem:[#allocation6 + $0x5c0] sm:$0xff]
    %v270 = vld [vmem:[#allocation6 + $0x5c8] sm:$0xff]
    %v271 = vld [vmem:[#allocation6 + $0x5d0] sm:$0xff]
    %v272 = vld [vmem:[#allocation6 + $0x5d8] sm:$0xff]
    %v273 = vld [vmem:[#allocation6 + $0x5e0] sm:$0xff]
    %v274 = vld [vmem:[#allocation6 + $0x5e8] sm:$0xff]
    %v275 = vld [vmem:[#allocation6 + $0x5f0] sm:$0xff]
    %v276 = vld [vmem:[#allocation6 + $0x5f8] sm:$0xff]
    %v297 = vunpack.c.l.b16 %v65
    %v298 = vunpack.c.h.b16 %v65
    %v299 = vunpack.c.l.b16 %v66
    %v300 = vunpack.c.h.b16 %v66
    %v301 = vunpack.c.l.b16 %v67
    %v302 = vunpack.c.h.b16 %v67
    %v303 = vunpack.c.l.b16 %v68
    %v304 = vunpack.c.h.b16 %v68
    %v305 = vunpack.c.l.b16 %v69
    %v306 = vunpack.c.h.b16 %v69
    %v307 = vunpack.c.l.b16 %v70
    %v308 = vunpack.c.h.b16 %v70
    %v309 = vunpack.c.l.b16 %v71
    %v310 = vunpack.c.h.b16 %v71
    %v311 = vunpack.c.l.b16 %v72
    %v312 = vunpack.c.h.b16 %v72
    %v313 = vunpack.c.l.b16 %v73
    %v314 = vunpack.c.h.b16 %v73
    %v315 = vunpack.c.l.b16 %v74
    %v316 = vunpack.c.h.b16 %v74
    %v317 = vunpack.c.l.b16 %v75
    %v318 = vunpack.c.h.b16 %v75
    %v319 = vunpack.c.l.b16 %v76
    %v320 = vunpack.c.h.b16 %v76
    %v321 = vunpack.c.l.b16 %v77
    %v322 = vunpack.c.h.b16 %v77
    %v323 = vunpack.c.l.b16 %v78
    %v324 = vunpack.c.h.b16 %v78
    %v325 = vunpack.c.l.b16 %v79
    %v326 = vunpack.c.h.b16 %v79
    %v327 = vunpack.c.l.b16 %v80
    %v328 = vunpack.c.h.b16 %v80
    %v329 = vunpack.c.l.b16 %v81
    %v330 = vunpack.c.h.b16 %v81
    %v331 = vunpack.c.l.b16 %v82
    %v332 = vunpack.c.h.b16 %v82
    %v333 = vunpack.c.l.b16 %v83
    %v334 = vunpack.c.h.b16 %v83
    %v335 = vunpack.c.l.b16 %v84
    %v336 = vunpack.c.h.b16 %v84
    %v337 = vpack.c.b16 %v301, %v297
    %v338 = vpack.c.b16 %v302, %v298
    %v339 = vpack.c.b16 %v303, %v299
    %v340 = vpack.c.b16 %v304, %v300
    %v341 = vpack.c.b16 %v309, %v305
    %v342 = vpack.c.b16 %v310, %v306
    %v343 = vpack.c.b16 %v311, %v307
    %v344 = vpack.c.b16 %v312, %v308
    %v345 = vpack.c.b16 %v317, %v313
    %v346 = vpack.c.b16 %v318, %v314
    %v347 = vpack.c.b16 %v319, %v315
    %v348 = vpack.c.b16 %v320, %v316
    %v349 = vpack.c.b16 %v325, %v321
    %v350 = vpack.c.b16 %v326, %v322
    %v351 = vpack.c.b16 %v327, %v323
    %v352 = vpack.c.b16 %v328, %v324
    %v353 = vpack.c.b16 %v333, %v329
    %v354 = vpack.c.b16 %v334, %v330
    %v355 = vpack.c.b16 %v335, %v331
    %v356 = vpack.c.b16 %v336, %v332
    %v569 = vunpack.c.l.b16 %v85
    %v570 = vunpack.c.h.b16 %v85
    %v571 = vunpack.c.l.b16 %v86
    %v572 = vunpack.c.h.b16 %v86
    %v573 = vunpack.c.l.b16 %v87
    %v574 = vunpack.c.h.b16 %v87
    %v575 = vunpack.c.l.b16 %v88
    %v576 = vunpack.c.h.b16 %v88
    %v577 = vunpack.c.l.b16 %v89
    %v578 = vunpack.c.h.b16 %v89
    %v579 = vunpack.c.l.b16 %v90
    %v580 = vunpack.c.h.b16 %v90
    %v581 = vunpack.c.l.b16 %v91
    %v582 = vunpack.c.h.b16 %v91
    %v583 = vunpack.c.l.b16 %v92
    %v584 = vunpack.c.h.b16 %v92
    %v585 = vunpack.c.l.b16 %v93
    %v586 = vunpack.c.h.b16 %v93
    %v587 = vunpack.c.l.b16 %v94
    %v588 = vunpack.c.h.b16 %v94
    %v589 = vunpack.c.l.b16 %v95
    %v590 = vunpack.c.h.b16 %v95
    %v591 = vunpack.c.l.b16 %v96
    %v592 = vunpack.c.h.b16 %v96
    %v593 = vunpack.c.l.b16 %v97
    %v594 = vunpack.c.h.b16 %v97
    %v595 = vunpack.c.l.b16 %v98
    %v596 = vunpack.c.h.b16 %v98
    %v597 = vunpack.c.l.b16 %v99
    %v598 = vunpack.c.h.b16 %v99
    %v599 = vunpack.c.l.b16 %v100
    %v600 = vunpack.c.h.b16 %v100
    %v601 = vunpack.c.l.b16 %v101
    %v602 = vunpack.c.h.b16 %v101
    %v603 = vunpack.c.l.b16 %v102
    %v604 = vunpack.c.h.b16 %v102
    %v605 = vunpack.c.l.b16 %v103
    %v606 = vunpack.c.h.b16 %v103
    %v607 = vunpack.c.l.b16 %v104
    %v608 = vunpack.c.h.b16 %v104
    %v609 = vunpack.c.l.b16 %v105
    %v610 = vunpack.c.h.b16 %v105
    %v611 = vunpack.c.l.b16 %v106
    %v612 = vunpack.c.h.b16 %v106
    %v613 = vunpack.c.l.b16 %v107
    %v614 = vunpack.c.h.b16 %v107
    %v615 = vunpack.c.l.b16 %v108
    %v616 = vunpack.c.h.b16 %v108
    %v617 = vunpack.c.l.b16 %v109
    %v618 = vunpack.c.h.b16 %v109
    %v619 = vunpack.c.l.b16 %v110
    %v620 = vunpack.c.h.b16 %v110
    %v621 = vunpack.c.l.b16 %v111
    %v622 = vunpack.c.h.b16 %v111
    %v623 = vunpack.c.l.b16 %v112
    %v624 = vunpack.c.h.b16 %v112
    %v625 = vunpack.c.l.b16 %v113
    %v626 = vunpack.c.h.b16 %v113
    %v627 = vunpack.c.l.b16 %v114
    %v628 = vunpack.c.h.b16 %v114
    %v629 = vunpack.c.l.b16 %v115
    %v630 = vunpack.c.h.b16 %v115
    %v631 = vunpack.c.l.b16 %v116
    %v632 = vunpack.c.h.b16 %v116
    %v633 = vunpack.c.l.b16 %v117
    %v634 = vunpack.c.h.b16 %v117
    %v635 = vunpack.c.l.b16 %v118
    %v636 = vunpack.c.h.b16 %v118
    %v637 = vunpack.c.l.b16 %v119
    %v638 = vunpack.c.h.b16 %v119
    %v639 = vunpack.c.l.b16 %v120
    %v640 = vunpack.c.h.b16 %v120
    %v641 = vunpack.c.l.b16 %v121
    %v642 = vunpack.c.h.b16 %v121
    %v643 = vunpack.c.l.b16 %v122
    %v644 = vunpack.c.h.b16 %v122
    %v645 = vunpack.c.l.b16 %v123
    %v646 = vunpack.c.h.b16 %v123
    %v647 = vunpack.c.l.b16 %v124
    %v648 = vunpack.c.h.b16 %v124
    %v649 = vunpack.c.l.b16 %v125
    %v650 = vunpack.c.h.b16 %v125
    %v651 = vunpack.c.l.b16 %v126
    %v652 = vunpack.c.h.b16 %v126
    %v653 = vunpack.c.l.b16 %v127
    %v654 = vunpack.c.h.b16 %v127
    %v655 = vunpack.c.l.b16 %v128
    %v656 = vunpack.c.h.b16 %v128
    %v657 = vunpack.c.l.b16 %v129
    %v658 = vunpack.c.h.b16 %v129
    %v659 = vunpack.c.l.b16 %v130
    %v660 = vunpack.c.h.b16 %v130
    %v661 = vunpack.c.l.b16 %v131
    %v662 = vunpack.c.h.b16 %v131
    %v663 = vunpack.c.l.b16 %v132
    %v664 = vunpack.c.h.b16 %v132
    %v665 = vunpack.c.l.b16 %v133
    %v666 = vunpack.c.h.b16 %v133
    %v667 = vunpack.c.l.b16 %v134
    %v668 = vunpack.c.h.b16 %v134
    %v669 = vunpack.c.l.b16 %v135
    %v670 = vunpack.c.h.b16 %v135
    %v671 = vunpack.c.l.b16 %v136
    %v672 = vunpack.c.h.b16 %v136
    %v673 = vunpack.c.l.b16 %v137
    %v674 = vunpack.c.h.b16 %v137
    %v675 = vunpack.c.l.b16 %v138
    %v676 = vunpack.c.h.b16 %v138
    %v677 = vunpack.c.l.b16 %v139
    %v678 = vunpack.c.h.b16 %v139
    %v679 = vunpack.c.l.b16 %v140
    %v680 = vunpack.c.h.b16 %v140
    %v681 = vunpack.c.l.b16 %v141
    %v682 = vunpack.c.h.b16 %v141
    %v683 = vunpack.c.l.b16 %v142
    %v684 = vunpack.c.h.b16 %v142
    %v685 = vunpack.c.l.b16 %v143
    %v686 = vunpack.c.h.b16 %v143
    %v687 = vunpack.c.l.b16 %v144
    %v688 = vunpack.c.h.b16 %v144
    %v689 = vunpack.c.l.b16 %v145
    %v690 = vunpack.c.h.b16 %v145
    %v691 = vunpack.c.l.b16 %v146
    %v692 = vunpack.c.h.b16 %v146
    %v693 = vunpack.c.l.b16 %v147
    %v694 = vunpack.c.h.b16 %v147
    %v695 = vunpack.c.l.b16 %v148
    %v696 = vunpack.c.h.b16 %v148
    %v697 = vunpack.c.l.b16 %v149
    %v698 = vunpack.c.h.b16 %v149
    %v699 = vunpack.c.l.b16 %v150
    %v700 = vunpack.c.h.b16 %v150
    %v701 = vunpack.c.l.b16 %v151
    %v702 = vunpack.c.h.b16 %v151
    %v703 = vunpack.c.l.b16 %v152
    %v704 = vunpack.c.h.b16 %v152
    %v705 = vunpack.c.l.b16 %v153
    %v706 = vunpack.c.h.b16 %v153
    %v707 = vunpack.c.l.b16 %v154
    %v708 = vunpack.c.h.b16 %v154
    %v709 = vunpack.c.l.b16 %v155
    %v710 = vunpack.c.h.b16 %v155
    %v711 = vunpack.c.l.b16 %v156
    %v712 = vunpack.c.h.b16 %v156
    %v713 = vunpack.c.l.b16 %v157
    %v714 = vunpack.c.h.b16 %v157
    %v715 = vunpack.c.l.b16 %v158
    %v716 = vunpack.c.h.b16 %v158
    %v717 = vunpack.c.l.b16 %v159
    %v718 = vunpack.c.h.b16 %v159
    %v719 = vunpack.c.l.b16 %v160
    %v720 = vunpack.c.h.b16 %v160
    %v721 = vunpack.c.l.b16 %v161
    %v722 = vunpack.c.h.b16 %v161
    %v723 = vunpack.c.l.b16 %v162
    %v724 = vunpack.c.h.b16 %v162
    %v725 = vunpack.c.l.b16 %v163
    %v726 = vunpack.c.h.b16 %v163
    %v727 = vunpack.c.l.b16 %v164
    %v728 = vunpack.c.h.b16 %v164
    %v729 = vunpack.c.l.b16 %v165
    %v730 = vunpack.c.h.b16 %v165
    %v731 = vunpack.c.l.b16 %v166
    %v732 = vunpack.c.h.b16 %v166
    %v733 = vunpack.c.l.b16 %v167
    %v734 = vunpack.c.h.b16 %v167
    %v735 = vunpack.c.l.b16 %v168
    %v736 = vunpack.c.h.b16 %v168
    %v737 = vunpack.c.l.b16 %v169
    %v738 = vunpack.c.h.b16 %v169
    %v739 = vunpack.c.l.b16 %v170
    %v740 = vunpack.c.h.b16 %v170
    %v741 = vunpack.c.l.b16 %v171
    %v742 = vunpack.c.h.b16 %v171
    %v743 = vunpack.c.l.b16 %v172
    %v744 = vunpack.c.h.b16 %v172
    %v745 = vunpack.c.l.b16 %v173
    %v746 = vunpack.c.h.b16 %v173
    %v747 = vunpack.c.l.b16 %v174
    %v748 = vunpack.c.h.b16 %v174
    %v749 = vunpack.c.l.b16 %v175
    %v750 = vunpack.c.h.b16 %v175
    %v751 = vunpack.c.l.b16 %v176
    %v752 = vunpack.c.h.b16 %v176
    %v753 = vunpack.c.l.b16 %v177
    %v754 = vunpack.c.h.b16 %v177
    %v755 = vunpack.c.l.b16 %v178
    %v756 = vunpack.c.h.b16 %v178
    %v757 = vunpack.c.l.b16 %v179
    %v758 = vunpack.c.h.b16 %v179
    %v759 = vunpack.c.l.b16 %v180
    %v760 = vunpack.c.h.b16 %v180
    %v761 = vunpack.c.l.b16 %v181
    %v762 = vunpack.c.h.b16 %v181
    %v763 = vunpack.c.l.b16 %v182
    %v764 = vunpack.c.h.b16 %v182
    %v765 = vunpack.c.l.b16 %v183
    %v766 = vunpack.c.h.b16 %v183
    %v767 = vunpack.c.l.b16 %v184
    %v768 = vunpack.c.h.b16 %v184
    %v769 = vunpack.c.l.b16 %v185
    %v770 = vunpack.c.h.b16 %v185
    %v771 = vunpack.c.l.b16 %v186
    %v772 = vunpack.c.h.b16 %v186
    %v773 = vunpack.c.l.b16 %v187
    %v774 = vunpack.c.h.b16 %v187
    %v775 = vunpack.c.l.b16 %v188
    %v776 = vunpack.c.h.b16 %v188
    %v777 = vunpack.c.l.b16 %v189
    %v778 = vunpack.c.h.b16 %v189
    %v779 = vunpack.c.l.b16 %v190
    %v780 = vunpack.c.h.b16 %v190
    %v781 = vunpack.c.l.b16 %v191
    %v782 = vunpack.c.h.b16 %v191
    %v783 = vunpack.c.l.b16 %v192
    %v784 = vunpack.c.h.b16 %v192
    %v785 = vunpack.c.l.b16 %v193
    %v786 = vunpack.c.h.b16 %v193
    %v787 = vunpack.c.l.b16 %v194
    %v788 = vunpack.c.h.b16 %v194
    %v789 = vunpack.c.l.b16 %v195
    %v790 = vunpack.c.h.b16 %v195
    %v791 = vunpack.c.l.b16 %v196
    %v792 = vunpack.c.h.b16 %v196
    %v793 = vunpack.c.l.b16 %v197
    %v794 = vunpack.c.h.b16 %v197
    %v795 = vunpack.c.l.b16 %v198
    %v796 = vunpack.c.h.b16 %v198
    %v797 = vunpack.c.l.b16 %v199
    %v798 = vunpack.c.h.b16 %v199
    %v799 = vunpack.c.l.b16 %v200
    %v800 = vunpack.c.h.b16 %v200
    %v801 = vunpack.c.l.b16 %v201
    %v802 = vunpack.c.h.b16 %v201
    %v803 = vunpack.c.l.b16 %v202
    %v804 = vunpack.c.h.b16 %v202
    %v805 = vunpack.c.l.b16 %v203
    %v806 = vunpack.c.h.b16 %v203
    %v807 = vunpack.c.l.b16 %v204
    %v808 = vunpack.c.h.b16 %v204
    %v809 = vunpack.c.l.b16 %v205
    %v810 = vunpack.c.h.b16 %v205
    %v811 = vunpack.c.l.b16 %v206
    %v812 = vunpack.c.h.b16 %v206
    %v813 = vunpack.c.l.b16 %v207
    %v814 = vunpack.c.h.b16 %v207
    %v815 = vunpack.c.l.b16 %v208
    %v816 = vunpack.c.h.b16 %v208
    %v817 = vunpack.c.l.b16 %v209
    %v818 = vunpack.c.h.b16 %v209
    %v819 = vunpack.c.l.b16 %v210
    %v820 = vunpack.c.h.b16 %v210
    %v821 = vunpack.c.l.b16 %v211
    %v822 = vunpack.c.h.b16 %v211
    %v823 = vunpack.c.l.b16 %v212
    %v824 = vunpack.c.h.b16 %v212
    %v825 = vunpack.c.l.b16 %v213
    %v826 = vunpack.c.h.b16 %v213
    %v827 = vunpack.c.l.b16 %v214
    %v828 = vunpack.c.h.b16 %v214
    %v829 = vunpack.c.l.b16 %v215
    %v830 = vunpack.c.h.b16 %v215
    %v831 = vunpack.c.l.b16 %v216
    %v832 = vunpack.c.h.b16 %v216
    %v833 = vunpack.c.l.b16 %v217
    %v834 = vunpack.c.h.b16 %v217
    %v835 = vunpack.c.l.b16 %v218
    %v836 = vunpack.c.h.b16 %v218
    %v837 = vunpack.c.l.b16 %v219
    %v838 = vunpack.c.h.b16 %v219
    %v839 = vunpack.c.l.b16 %v220
    %v840 = vunpack.c.h.b16 %v220
    %v841 = vunpack.c.l.b16 %v221
    %v842 = vunpack.c.h.b16 %v221
    %v843 = vunpack.c.l.b16 %v222
    %v844 = vunpack.c.h.b16 %v222
    %v845 = vunpack.c.l.b16 %v223
    %v846 = vunpack.c.h.b16 %v223
    %v847 = vunpack.c.l.b16 %v224
    %v848 = vunpack.c.h.b16 %v224
    %v849 = vunpack.c.l.b16 %v225
    %v850 = vunpack.c.h.b16 %v225
    %v851 = vunpack.c.l.b16 %v226
    %v852 = vunpack.c.h.b16 %v226
    %v853 = vunpack.c.l.b16 %v227
    %v854 = vunpack.c.h.b16 %v227
    %v855 = vunpack.c.l.b16 %v228
    %v856 = vunpack.c.h.b16 %v228
    %v857 = vunpack.c.l.b16 %v229
    %v858 = vunpack.c.h.b16 %v229
    %v859 = vunpack.c.l.b16 %v230
    %v860 = vunpack.c.h.b16 %v230
    %v861 = vunpack.c.l.b16 %v231
    %v862 = vunpack.c.h.b16 %v231
    %v863 = vunpack.c.l.b16 %v232
    %v864 = vunpack.c.h.b16 %v232
    %v865 = vunpack.c.l.b16 %v233
    %v866 = vunpack.c.h.b16 %v233
    %v867 = vunpack.c.l.b16 %v234
    %v868 = vunpack.c.h.b16 %v234
    %v869 = vunpack.c.l.b16 %v235
    %v870 = vunpack.c.h.b16 %v235
    %v871 = vunpack.c.l.b16 %v236
    %v872 = vunpack.c.h.b16 %v236
    %v873 = vunpack.c.l.b16 %v237
    %v874 = vunpack.c.h.b16 %v237
    %v875 = vunpack.c.l.b16 %v238
    %v876 = vunpack.c.h.b16 %v238
    %v877 = vunpack.c.l.b16 %v239
    %v878 = vunpack.c.h.b16 %v239
    %v879 = vunpack.c.l.b16 %v240
    %v880 = vunpack.c.h.b16 %v240
    %v881 = vunpack.c.l.b16 %v241
    %v882 = vunpack.c.h.b16 %v241
    %v883 = vunpack.c.l.b16 %v242
    %v884 = vunpack.c.h.b16 %v242
    %v885 = vunpack.c.l.b16 %v243
    %v886 = vunpack.c.h.b16 %v243
    %v887 = vunpack.c.l.b16 %v244
    %v888 = vunpack.c.h.b16 %v244
    %v889 = vunpack.c.l.b16 %v245
    %v890 = vunpack.c.h.b16 %v245
    %v891 = vunpack.c.l.b16 %v246
    %v892 = vunpack.c.h.b16 %v246
    %v893 = vunpack.c.l.b16 %v247
    %v894 = vunpack.c.h.b16 %v247
    %v895 = vunpack.c.l.b16 %v248
    %v896 = vunpack.c.h.b16 %v248
    %v897 = vunpack.c.l.b16 %v249
    %v898 = vunpack.c.h.b16 %v249
    %v899 = vunpack.c.l.b16 %v250
    %v900 = vunpack.c.h.b16 %v250
    %v901 = vunpack.c.l.b16 %v251
    %v902 = vunpack.c.h.b16 %v251
    %v903 = vunpack.c.l.b16 %v252
    %v904 = vunpack.c.h.b16 %v252
    %v905 = vunpack.c.l.b16 %v253
    %v906 = vunpack.c.h.b16 %v253
    %v907 = vunpack.c.l.b16 %v254
    %v908 = vunpack.c.h.b16 %v254
    %v909 = vunpack.c.l.b16 %v255
    %v910 = vunpack.c.h.b16 %v255
    %v911 = vunpack.c.l.b16 %v256
    %v912 = vunpack.c.h.b16 %v256
    %v913 = vunpack.c.l.b16 %v257
    %v914 = vunpack.c.h.b16 %v257
    %v915 = vunpack.c.l.b16 %v258
    %v916 = vunpack.c.h.b16 %v258
    %v917 = vunpack.c.l.b16 %v259
    %v918 = vunpack.c.h.b16 %v259
    %v919 = vunpack.c.l.b16 %v260
    %v920 = vunpack.c.h.b16 %v260
    %v921 = vunpack.c.l.b16 %v261
    %v922 = vunpack.c.h.b16 %v261
    %v923 = vunpack.c.l.b16 %v262
    %v924 = vunpack.c.h.b16 %v262
    %v925 = vunpack.c.l.b16 %v263
    %v926 = vunpack.c.h.b16 %v263
    %v927 = vunpack.c.l.b16 %v264
    %v928 = vunpack.c.h.b16 %v264
    %v929 = vunpack.c.l.b16 %v265
    %v930 = vunpack.c.h.b16 %v265
    %v931 = vunpack.c.l.b16 %v266
    %v932 = vunpack.c.h.b16 %v266
    %v933 = vunpack.c.l.b16 %v267
    %v934 = vunpack.c.h.b16 %v267
    %v935 = vunpack.c.l.b16 %v268
    %v936 = vunpack.c.h.b16 %v268
    %v937 = vunpack.c.l.b16 %v269
    %v938 = vunpack.c.h.b16 %v269
    %v939 = vunpack.c.l.b16 %v270
    %v940 = vunpack.c.h.b16 %v270
    %v941 = vunpack.c.l.b16 %v271
    %v942 = vunpack.c.h.b16 %v271
    %v943 = vunpack.c.l.b16 %v272
    %v944 = vunpack.c.h.b16 %v272
    %v945 = vunpack.c.l.b16 %v273
    %v946 = vunpack.c.h.b16 %v273
    %v947 = vunpack.c.l.b16 %v274
    %v948 = vunpack.c.h.b16 %v274
    %v949 = vunpack.c.l.b16 %v275
    %v950 = vunpack.c.h.b16 %v275
    %v951 = vunpack.c.l.b16 %v276
    %v952 = vunpack.c.h.b16 %v276
    %v953 = vpack.c.b16 %v575, %v569
    %v954 = vpack.c.b16 %v576, %v570
    %v955 = vpack.c.b16 %v577, %v571
    %v956 = vpack.c.b16 %v578, %v572
    %v957 = vpack.c.b16 %v579, %v573
    %v958 = vpack.c.b16 %v580, %v574
    %v959 = vpack.c.b16 %v587, %v581
    %v960 = vpack.c.b16 %v588, %v582
    %v961 = vpack.c.b16 %v589, %v583
    %v962 = vpack.c.b16 %v590, %v584
    %v963 = vpack.c.b16 %v591, %v585
    %v964 = vpack.c.b16 %v592, %v586
    %v965 = vpack.c.b16 %v599, %v593
    %v966 = vpack.c.b16 %v600, %v594
    %v967 = vpack.c.b16 %v601, %v595
    %v968 = vpack.c.b16 %v602, %v596
    %v969 = vpack.c.b16 %v603, %v597
    %v970 = vpack.c.b16 %v604, %v598
    %v971 = vpack.c.b16 %v611, %v605
    %v972 = vpack.c.b16 %v612, %v606
    %v973 = vpack.c.b16 %v613, %v607
    %v974 = vpack.c.b16 %v614, %v608
    %v975 = vpack.c.b16 %v615, %v609
    %v976 = vpack.c.b16 %v616, %v610
    %v977 = vpack.c.b16 %v623, %v617
    %v978 = vpack.c.b16 %v624, %v618
    %v979 = vpack.c.b16 %v625, %v619
    %v980 = vpack.c.b16 %v626, %v620
    %v981 = vpack.c.b16 %v627, %v621
    %v982 = vpack.c.b16 %v628, %v622
    %v983 = vpack.c.b16 %v635, %v629
    %v984 = vpack.c.b16 %v636, %v630
    %v985 = vpack.c.b16 %v637, %v631
    %v986 = vpack.c.b16 %v638, %v632
    %v987 = vpack.c.b16 %v639, %v633
    %v988 = vpack.c.b16 %v640, %v634
    %v989 = vpack.c.b16 %v647, %v641
    %v990 = vpack.c.b16 %v648, %v642
    %v991 = vpack.c.b16 %v649, %v643
    %v992 = vpack.c.b16 %v650, %v644
    %v993 = vpack.c.b16 %v651, %v645
    %v994 = vpack.c.b16 %v652, %v646
    %v995 = vpack.c.b16 %v659, %v653
    %v996 = vpack.c.b16 %v660, %v654
    %v997 = vpack.c.b16 %v661, %v655
    %v998 = vpack.c.b16 %v662, %v656
    %v999 = vpack.c.b16 %v663, %v657
    %v1000 = vpack.c.b16 %v664, %v658
    %v1001 = vpack.c.b16 %v671, %v665
    %v1002 = vpack.c.b16 %v672, %v666
    %v1003 = vpack.c.b16 %v673, %v667
    %v1004 = vpack.c.b16 %v674, %v668
    %v1005 = vpack.c.b16 %v675, %v669
    %v1006 = vpack.c.b16 %v676, %v670
    %v1007 = vpack.c.b16 %v683, %v677
    %v1008 = vpack.c.b16 %v684, %v678
    %v1009 = vpack.c.b16 %v685, %v679
    %v1010 = vpack.c.b16 %v686, %v680
    %v1011 = vpack.c.b16 %v687, %v681
    %v1012 = vpack.c.b16 %v688, %v682
    %v1013 = vpack.c.b16 %v695, %v689
    %v1014 = vpack.c.b16 %v696, %v690
    %v1015 = vpack.c.b16 %v697, %v691
    %v1016 = vpack.c.b16 %v698, %v692
    %v1017 = vpack.c.b16 %v699, %v693
    %v1018 = vpack.c.b16 %v700, %v694
    %v1019 = vpack.c.b16 %v707, %v701
    %v1020 = vpack.c.b16 %v708, %v702
    %v1021 = vpack.c.b16 %v709, %v703
    %v1022 = vpack.c.b16 %v710, %v704
    %v1023 = vpack.c.b16 %v711, %v705
    %v1024 = vpack.c.b16 %v712, %v706
    %v1025 = vpack.c.b16 %v719, %v713
    %v1026 = vpack.c.b16 %v720, %v714
    %v1027 = vpack.c.b16 %v721, %v715
    %v1028 = vpack.c.b16 %v722, %v716
    %v1029 = vpack.c.b16 %v723, %v717
    %v1030 = vpack.c.b16 %v724, %v718
    %v1031 = vpack.c.b16 %v731, %v725
    %v1032 = vpack.c.b16 %v732, %v726
    %v1033 = vpack.c.b16 %v733, %v727
    %v1034 = vpack.c.b16 %v734, %v728
    %v1035 = vpack.c.b16 %v735, %v729
    %v1036 = vpack.c.b16 %v736, %v730
    %v1037 = vpack.c.b16 %v743, %v737
    %v1038 = vpack.c.b16 %v744, %v738
    %v1039 = vpack.c.b16 %v745, %v739
    %v1040 = vpack.c.b16 %v746, %v740
    %v1041 = vpack.c.b16 %v747, %v741
    %v1042 = vpack.c.b16 %v748, %v742
    %v1043 = vpack.c.b16 %v755, %v749
    %v1044 = vpack.c.b16 %v756, %v750
    %v1045 = vpack.c.b16 %v757, %v751
    %v1046 = vpack.c.b16 %v758, %v752
    %v1047 = vpack.c.b16 %v759, %v753
    %v1048 = vpack.c.b16 %v760, %v754
    %v1049 = vpack.c.b16 %v767, %v761
    %v1050 = vpack.c.b16 %v768, %v762
    %v1051 = vpack.c.b16 %v769, %v763
    %v1052 = vpack.c.b16 %v770, %v764
    %v1053 = vpack.c.b16 %v771, %v765
    %v1054 = vpack.c.b16 %v772, %v766
    %v1055 = vpack.c.b16 %v779, %v773
    %v1056 = vpack.c.b16 %v780, %v774
    %v1057 = vpack.c.b16 %v781, %v775
    %v1058 = vpack.c.b16 %v782, %v776
    %v1059 = vpack.c.b16 %v783, %v777
    %v1060 = vpack.c.b16 %v784, %v778
    %v1061 = vpack.c.b16 %v791, %v785
    %v1062 = vpack.c.b16 %v792, %v786
    %v1063 = vpack.c.b16 %v793, %v787
    %v1064 = vpack.c.b16 %v794, %v788
    %v1065 = vpack.c.b16 %v795, %v789
    %v1066 = vpack.c.b16 %v796, %v790
    %v1067 = vpack.c.b16 %v803, %v797
    %v1068 = vpack.c.b16 %v804, %v798
    %v1069 = vpack.c.b16 %v805, %v799
    %v1070 = vpack.c.b16 %v806, %v800
    %v1071 = vpack.c.b16 %v807, %v801
    %v1072 = vpack.c.b16 %v808, %v802
    %v1073 = vpack.c.b16 %v815, %v809
    %v1074 = vpack.c.b16 %v816, %v810
    %v1075 = vpack.c.b16 %v817, %v811
    %v1076 = vpack.c.b16 %v818, %v812
    %v1077 = vpack.c.b16 %v819, %v813
    %v1078 = vpack.c.b16 %v820, %v814
    %v1079 = vpack.c.b16 %v827, %v821
    %v1080 = vpack.c.b16 %v828, %v822
    %v1081 = vpack.c.b16 %v829, %v823
    %v1082 = vpack.c.b16 %v830, %v824
    %v1083 = vpack.c.b16 %v831, %v825
    %v1084 = vpack.c.b16 %v832, %v826
    %v1085 = vpack.c.b16 %v839, %v833
    %v1086 = vpack.c.b16 %v840, %v834
    %v1087 = vpack.c.b16 %v841, %v835
    %v1088 = vpack.c.b16 %v842, %v836
    %v1089 = vpack.c.b16 %v843, %v837
    %v1090 = vpack.c.b16 %v844, %v838
    %v1091 = vpack.c.b16 %v851, %v845
    %v1092 = vpack.c.b16 %v852, %v846
    %v1093 = vpack.c.b16 %v853, %v847
    %v1094 = vpack.c.b16 %v854, %v848
    %v1095 = vpack.c.b16 %v855, %v849
    %v1096 = vpack.c.b16 %v856, %v850
    %v1097 = vpack.c.b16 %v863, %v857
    %v1098 = vpack.c.b16 %v864, %v858
    %v1099 = vpack.c.b16 %v865, %v859
    %v1100 = vpack.c.b16 %v866, %v860
    %v1101 = vpack.c.b16 %v867, %v861
    %v1102 = vpack.c.b16 %v868, %v862
    %v1103 = vpack.c.b16 %v875, %v869
    %v1104 = vpack.c.b16 %v876, %v870
    %v1105 = vpack.c.b16 %v877, %v871
    %v1106 = vpack.c.b16 %v878, %v872
    %v1107 = vpack.c.b16 %v879, %v873
    %v1108 = vpack.c.b16 %v880, %v874
    %v1109 = vpack.c.b16 %v887, %v881
    %v1110 = vpack.c.b16 %v888, %v882
    %v1111 = vpack.c.b16 %v889, %v883
    %v1112 = vpack.c.b16 %v890, %v884
    %v1113 = vpack.c.b16 %v891, %v885
    %v1114 = vpack.c.b16 %v892, %v886
    %v1115 = vpack.c.b16 %v899, %v893
    %v1116 = vpack.c.b16 %v900, %v894
    %v1117 = vpack.c.b16 %v901, %v895
    %v1118 = vpack.c.b16 %v902, %v896
    %v1119 = vpack.c.b16 %v903, %v897
    %v1120 = vpack.c.b16 %v904, %v898
    %v1121 = vpack.c.b16 %v911, %v905
    %v1122 = vpack.c.b16 %v912, %v906
    %v1123 = vpack.c.b16 %v913, %v907
    %v1124 = vpack.c.b16 %v914, %v908
    %v1125 = vpack.c.b16 %v915, %v909
    %v1126 = vpack.c.b16 %v916, %v910
    %v1127 = vpack.c.b16 %v923, %v917
    %v1128 = vpack.c.b16 %v924, %v918
    %v1129 = vpack.c.b16 %v925, %v919
    %v1130 = vpack.c.b16 %v926, %v920
    %v1131 = vpack.c.b16 %v927, %v921
    %v1132 = vpack.c.b16 %v928, %v922
    %v1133 = vpack.c.b16 %v935, %v929
    %v1134 = vpack.c.b16 %v936, %v930
    %v1135 = vpack.c.b16 %v937, %v931
    %v1136 = vpack.c.b16 %v938, %v932
    %v1137 = vpack.c.b16 %v939, %v933
    %v1138 = vpack.c.b16 %v940, %v934
    %v1139 = vpack.c.b16 %v947, %v941
    %v1140 = vpack.c.b16 %v948, %v942
    %v1141 = vpack.c.b16 %v949, %v943
    %v1142 = vpack.c.b16 %v950, %v944
    %v1143 = vpack.c.b16 %v951, %v945
    %v1144 = vpack.c.b16 %v952, %v946
    %1337 = vmatpush.bf16.msra.mxu0 %v995
    %1338 = vmatpush.bf16.msra.mxu0 %v989
    %1339 = vmatpush.bf16.msra.mxu0 %v983
    %1340 = vmatpush.bf16.msra.mxu0 %v977
    %1341 = vmatpush.bf16.msra.mxu0 %v971
    %1342 = vmatpush.bf16.msra.mxu0 %v965
    %1343 = vmatpush.bf16.msra.mxu0 %v959
    %1344 = vmatpush.bf16.msra.mxu0 %v953
    %1345 = vmatmul.bf16.gmra.mxu0 %v337
    %v1346 = vpop.f32.mrf.mxu0
    %v1347 = vadd.f32 0.0, %v1346
    %v1348 = vpop.f32.mrf.mxu0
    %v1349 = vadd.f32 0.0, %v1348
    %1350 = vmatmul.bf16.gmra.mxu0 %v341
    %v1351 = vpop.f32.mrf.mxu0
    %v1352 = vadd.f32 0.0, %v1351
    %v1353 = vpop.f32.mrf.mxu0
    %v1354 = vadd.f32 0.0, %v1353
    %1355 = vmatmul.bf16.gmra.mxu0 %v345
    %v1356 = vpop.f32.mrf.mxu0
    %v1357 = vadd.f32 0.0, %v1356
    %v1358 = vpop.f32.mrf.mxu0
    %v1359 = vadd.f32 0.0, %v1358
    %1360 = vmatmul.bf16.gmra.mxu0 %v349
    %v1361 = vpop.f32.mrf.mxu0
    %v1362 = vadd.f32 0.0, %v1361
    %v1363 = vpop.f32.mrf.mxu0
    %v1364 = vadd.f32 0.0, %v1363
    %1365 = vmatmul.bf16.gmra.mxu0 %v353
    %v1366 = vpop.f32.mrf.mxu0
    %v1367 = vadd.f32 0.0, %v1366
    %v1368 = vpop.f32.mrf.mxu0
    %v1369 = vadd.f32 0.0, %v1368
    %1370 = vdwg.mxu0
    %1371 = vmatpush.bf16.msra.mxu0 %v1043
    %1372 = vmatpush.bf16.msra.mxu0 %v1037
    %1373 = vmatpush.bf16.msra.mxu0 %v1031
    %1374 = vmatpush.bf16.msra.mxu0 %v1025
    %1375 = vmatpush.bf16.msra.mxu0 %v1019
    %1376 = vmatpush.bf16.msra.mxu0 %v1013
    %1377 = vmatpush.bf16.msra.mxu0 %v1007
    %1378 = vmatpush.bf16.msra.mxu0 %v1001
    %1379 = vmatmul.bf16.gmra.mxu0 %v338
    %v1380 = vpop.f32.mrf.mxu0
    %v1381 = vadd.f32 %v1347, %v1380
    %v1382 = vpop.f32.mrf.mxu0
    %v1383 = vadd.f32 %v1349, %v1382
    %1384 = vmatmul.bf16.gmra.mxu0 %v342
    %v1385 = vpop.f32.mrf.mxu0
    %v1386 = vadd.f32 %v1352, %v1385
    %v1387 = vpop.f32.mrf.mxu0
    %v1388 = vadd.f32 %v1354, %v1387
    %1389 = vmatmul.bf16.gmra.mxu0 %v346
    %v1390 = vpop.f32.mrf.mxu0
    %v1391 = vadd.f32 %v1357, %v1390
    %v1392 = vpop.f32.mrf.mxu0
    %v1393 = vadd.f32 %v1359, %v1392
    %1394 = vmatmul.bf16.gmra.mxu0 %v350
    %v1395 = vpop.f32.mrf.mxu0
    %v1396 = vadd.f32 %v1362, %v1395
    %v1397 = vpop.f32.mrf.mxu0
    %v1398 = vadd.f32 %v1364, %v1397
    %1399 = vmatmul.bf16.gmra.mxu0 %v354
    %v1400 = vpop.f32.mrf.mxu0
    %v1401 = vadd.f32 %v1367, %v1400
    %v1402 = vpop.f32.mrf.mxu0
    %v1403 = vadd.f32 %v1369, %v1402
    %1404 = vdwg.mxu0
    %1405 = vmatpush.bf16.msra.mxu0 %v1091
    %1406 = vmatpush.bf16.msra.mxu0 %v1085
    %1407 = vmatpush.bf16.msra.mxu0 %v1079
    %1408 = vmatpush.bf16.msra.mxu0 %v1073
    %1409 = vmatpush.bf16.msra.mxu0 %v1067
    %1410 = vmatpush.bf16.msra.mxu0 %v1061
    %1411 = vmatpush.bf16.msra.mxu0 %v1055
    %1412 = vmatpush.bf16.msra.mxu0 %v1049
    %1413 = vmatmul.bf16.gmra.mxu0 %v339
    %v1414 = vpop.f32.mrf.mxu0
    %v1415 = vadd.f32 %v1381, %v1414
    %v1416 = vpop.f32.mrf.mxu0
    %v1417 = vadd.f32 %v1383, %v1416
    %1418 = vmatmul.bf16.gmra.mxu0 %v343
    %v1419 = vpop.f32.mrf.mxu0
    %v1420 = vadd.f32 %v1386, %v1419
    %v1421 = vpop.f32.mrf.mxu0
    %v1422 = vadd.f32 %v1388, %v1421
    %1423 = vmatmul.bf16.gmra.mxu0 %v347
    %v1424 = vpop.f32.mrf.mxu0
    %v1425 = vadd.f32 %v1391, %v1424
    %v1426 = vpop.f32.mrf.mxu0
    %v1427 = vadd.f32 %v1393, %v1426
    %1428 = vmatmul.bf16.gmra.mxu0 %v351
    %v1429 = vpop.f32.mrf.mxu0
    %v1430 = vadd.f32 %v1396, %v1429
    %v1431 = vpop.f32.mrf.mxu0
    %v1432 = vadd.f32 %v1398, %v1431
    %1433 = vmatmul.bf16.gmra.mxu0 %v355
    %v1434 = vpop.f32.mrf.mxu0
    %v1435 = vadd.f32 %v1401, %v1434
    %v1436 = vpop.f32.mrf.mxu0
    %v1437 = vadd.f32 %v1403, %v1436
    %1438 = vdwg.mxu0
    %1439 = vmatpush.bf16.msra.mxu0 %v1139
    %1440 = vmatpush.bf16.msra.mxu0 %v1133
    %1441 = vmatpush.bf16.msra.mxu0 %v1127
    %1442 = vmatpush.bf16.msra.mxu0 %v1121
    %1443 = vmatpush.bf16.msra.mxu0 %v1115
    %1444 = vmatpush.bf16.msra.mxu0 %v1109
    %1445 = vmatpush.bf16.msra.mxu0 %v1103
    %1446 = vmatpush.bf16.msra.mxu0 %v1097
    %1447 = vmatmul.bf16.gmra.mxu0 %v340
    %v1448 = vpop.f32.mrf.mxu0
    %v1449 = vadd.f32 %v1415, %v1448
    %v1450 = vpop.f32.mrf.mxu0
    %v1451 = vadd.f32 %v1417, %v1450
    %1452 = vmatmul.bf16.gmra.mxu0 %v344
    %v1453 = vpop.f32.mrf.mxu0
    %v1454 = vadd.f32 %v1420, %v1453
    %v1455 = vpop.f32.mrf.mxu0
    %v1456 = vadd.f32 %v1422, %v1455
    %1457 = vmatmul.bf16.gmra.mxu0 %v348
    %v1458 = vpop.f32.mrf.mxu0
    %v1459 = vadd.f32 %v1425, %v1458
    %v1460 = vpop.f32.mrf.mxu0
    %v1461 = vadd.f32 %v1427, %v1460
    %1462 = vmatmul.bf16.gmra.mxu0 %v352
    %v1463 = vpop.f32.mrf.mxu0
    %v1464 = vadd.f32 %v1430, %v1463
    %v1465 = vpop.f32.mrf.mxu0
    %v1466 = vadd.f32 %v1432, %v1465
    %1467 = vmatmul.bf16.gmra.mxu0 %v356
    %v1468 = vpop.f32.mrf.mxu0
    %v1469 = vadd.f32 %v1435, %v1468
    %v1470 = vpop.f32.mrf.mxu0
    %v1471 = vadd.f32 %v1437, %v1470
    %1472 = vdwg.mxu0
    %1473 = vmatpush.bf16.msra.mxu0 %v996
    %1474 = vmatpush.bf16.msra.mxu0 %v990
    %1475 = vmatpush.bf16.msra.mxu0 %v984
    %1476 = vmatpush.bf16.msra.mxu0 %v978
    %1477 = vmatpush.bf16.msra.mxu0 %v972
    %1478 = vmatpush.bf16.msra.mxu0 %v966
    %1479 = vmatpush.bf16.msra.mxu0 %v960
    %1480 = vmatpush.bf16.msra.mxu0 %v954
    %1481 = vmatmul.bf16.gmra.mxu0 %v337
    %v1482 = vpop.f32.mrf.mxu0
    %v1483 = vadd.f32 0.0, %v1482
    %v1484 = vpop.f32.mrf.mxu0
    %v1485 = vadd.f32 0.0, %v1484
    %1486 = vmatmul.bf16.gmra.mxu0 %v341
    %v1487 = vpop.f32.mrf.mxu0
    %v1488 = vadd.f32 0.0, %v1487
    %v1489 = vpop.f32.mrf.mxu0
    %v1490 = vadd.f32 0.0, %v1489
    %1491 = vmatmul.bf16.gmra.mxu0 %v345
    %v1492 = vpop.f32.mrf.mxu0
    %v1493 = vadd.f32 0.0, %v1492
    %v1494 = vpop.f32.mrf.mxu0
    %v1495 = vadd.f32 0.0, %v1494
    %1496 = vmatmul.bf16.gmra.mxu0 %v349
    %v1497 = vpop.f32.mrf.mxu0
    %v1498 = vadd.f32 0.0, %v1497
    %v1499 = vpop.f32.mrf.mxu0
    %v1500 = vadd.f32 0.0, %v1499
    %1501 = vmatmul.bf16.gmra.mxu0 %v353
    %v1502 = vpop.f32.mrf.mxu0
    %v1503 = vadd.f32 0.0, %v1502
    %v1504 = vpop.f32.mrf.mxu0
    %v1505 = vadd.f32 0.0, %v1504
    %1506 = vdwg.mxu0
    %1507 = vmatpush.bf16.msra.mxu0 %v1044
    %1508 = vmatpush.bf16.msra.mxu0 %v1038
    %1509 = vmatpush.bf16.msra.mxu0 %v1032
    %1510 = vmatpush.bf16.msra.mxu0 %v1026
    %1511 = vmatpush.bf16.msra.mxu0 %v1020
    %1512 = vmatpush.bf16.msra.mxu0 %v1014
    %1513 = vmatpush.bf16.msra.mxu0 %v1008
    %1514 = vmatpush.bf16.msra.mxu0 %v1002
    %1515 = vmatmul.bf16.gmra.mxu0 %v338
    %v1516 = vpop.f32.mrf.mxu0
    %v1517 = vadd.f32 %v1483, %v1516
    %v1518 = vpop.f32.mrf.mxu0
    %v1519 = vadd.f32 %v1485, %v1518
    %1520 = vmatmul.bf16.gmra.mxu0 %v342
    %v1521 = vpop.f32.mrf.mxu0
    %v1522 = vadd.f32 %v1488, %v1521
    %v1523 = vpop.f32.mrf.mxu0
    %v1524 = vadd.f32 %v1490, %v1523
    %1525 = vmatmul.bf16.gmra.mxu0 %v346
    %v1526 = vpop.f32.mrf.mxu0
    %v1527 = vadd.f32 %v1493, %v1526
    %v1528 = vpop.f32.mrf.mxu0
    %v1529 = vadd.f32 %v1495, %v1528
    %1530 = vmatmul.bf16.gmra.mxu0 %v350
    %v1531 = vpop.f32.mrf.mxu0
    %v1532 = vadd.f32 %v1498, %v1531
    %v1533 = vpop.f32.mrf.mxu0
    %v1534 = vadd.f32 %v1500, %v1533
    %1535 = vmatmul.bf16.gmra.mxu0 %v354
    %v1536 = vpop.f32.mrf.mxu0
    %v1537 = vadd.f32 %v1503, %v1536
    %v1538 = vpop.f32.mrf.mxu0
    %v1539 = vadd.f32 %v1505, %v1538
    %1540 = vdwg.mxu0
    %1541 = vmatpush.bf16.msra.mxu0 %v1092
    %1542 = vmatpush.bf16.msra.mxu0 %v1086
    %1543 = vmatpush.bf16.msra.mxu0 %v1080
    %1544 = vmatpush.bf16.msra.mxu0 %v1074
    %1545 = vmatpush.bf16.msra.mxu0 %v1068
    %1546 = vmatpush.bf16.msra.mxu0 %v1062
    %1547 = vmatpush.bf16.msra.mxu0 %v1056
    %1548 = vmatpush.bf16.msra.mxu0 %v1050
    %1549 = vmatmul.bf16.gmra.mxu0 %v339
    %v1550 = vpop.f32.mrf.mxu0
    %v1551 = vadd.f32 %v1517, %v1550
    %v1552 = vpop.f32.mrf.mxu0
    %v1553 = vadd.f32 %v1519, %v1552
    %1554 = vmatmul.bf16.gmra.mxu0 %v343
    %v1555 = vpop.f32.mrf.mxu0
    %v1556 = vadd.f32 %v1522, %v1555
    %v1557 = vpop.f32.mrf.mxu0
    %v1558 = vadd.f32 %v1524, %v1557
    %1559 = vmatmul.bf16.gmra.mxu0 %v347
    %v1560 = vpop.f32.mrf.mxu0
    %v1561 = vadd.f32 %v1527, %v1560
    %v1562 = vpop.f32.mrf.mxu0
    %v1563 = vadd.f32 %v1529, %v1562
    %1564 = vmatmul.bf16.gmra.mxu0 %v351
    %v1565 = vpop.f32.mrf.mxu0
    %v1566 = vadd.f32 %v1532, %v1565
    %v1567 = vpop.f32.mrf.mxu0
    %v1568 = vadd.f32 %v1534, %v1567
    %1569 = vmatmul.bf16.gmra.mxu0 %v355
    %v1570 = vpop.f32.mrf.mxu0
    %v1571 = vadd.f32 %v1537, %v1570
    %v1572 = vpop.f32.mrf.mxu0
    %v1573 = vadd.f32 %v1539, %v1572
    %1574 = vdwg.mxu0
    %1575 = vmatpush.bf16.msra.mxu0 %v1140
    %1576 = vmatpush.bf16.msra.mxu0 %v1134
    %1577 = vmatpush.bf16.msra.mxu0 %v1128
    %1578 = vmatpush.bf16.msra.mxu0 %v1122
    %1579 = vmatpush.bf16.msra.mxu0 %v1116
    %1580 = vmatpush.bf16.msra.mxu0 %v1110
    %1581 = vmatpush.bf16.msra.mxu0 %v1104
    %1582 = vmatpush.bf16.msra.mxu0 %v1098
    %1583 = vmatmul.bf16.gmra.mxu0 %v340
    %v1584 = vpop.f32.mrf.mxu0
    %v1585 = vadd.f32 %v1551, %v1584
    %v1586 = vpop.f32.mrf.mxu0
    %v1587 = vadd.f32 %v1553, %v1586
    %1588 = vmatmul.bf16.gmra.mxu0 %v344
    %v1589 = vpop.f32.mrf.mxu0
    %v1590 = vadd.f32 %v1556, %v1589
    %v1591 = vpop.f32.mrf.mxu0
    %v1592 = vadd.f32 %v1558, %v1591
    %1593 = vmatmul.bf16.gmra.mxu0 %v348
    %v1594 = vpop.f32.mrf.mxu0
    %v1595 = vadd.f32 %v1561, %v1594
    %v1596 = vpop.f32.mrf.mxu0
    %v1597 = vadd.f32 %v1563, %v1596
    %1598 = vmatmul.bf16.gmra.mxu0 %v352
    %v1599 = vpop.f32.mrf.mxu0
    %v1600 = vadd.f32 %v1566, %v1599
    %v1601 = vpop.f32.mrf.mxu0
    %v1602 = vadd.f32 %v1568, %v1601
    %1603 = vmatmul.bf16.gmra.mxu0 %v356
    %v1604 = vpop.f32.mrf.mxu0
    %v1605 = vadd.f32 %v1571, %v1604
    %v1606 = vpop.f32.mrf.mxu0
    %v1607 = vadd.f32 %v1573, %v1606
    %1608 = vdwg.mxu0
    %1609 = vmatpush.bf16.msra.mxu0 %v997
    %1610 = vmatpush.bf16.msra.mxu0 %v991
    %1611 = vmatpush.bf16.msra.mxu0 %v985
    %1612 = vmatpush.bf16.msra.mxu0 %v979
    %1613 = vmatpush.bf16.msra.mxu0 %v973
    %1614 = vmatpush.bf16.msra.mxu0 %v967
    %1615 = vmatpush.bf16.msra.mxu0 %v961
    %1616 = vmatpush.bf16.msra.mxu0 %v955
    %1617 = vmatmul.bf16.gmra.mxu0 %v337
    %v1618 = vpop.f32.mrf.mxu0
    %v1619 = vadd.f32 0.0, %v1618
    %v1620 = vpop.f32.mrf.mxu0
    %v1621 = vadd.f32 0.0, %v1620
    %1622 = vmatmul.bf16.gmra.mxu0 %v341
    %v1623 = vpop.f32.mrf.mxu0
    %v1624 = vadd.f32 0.0, %v1623
    %v1625 = vpop.f32.mrf.mxu0
    %v1626 = vadd.f32 0.0, %v1625
    %1627 = vmatmul.bf16.gmra.mxu0 %v345
    %v1628 = vpop.f32.mrf.mxu0
    %v1629 = vadd.f32 0.0, %v1628
    %v1630 = vpop.f32.mrf.mxu0
    %v1631 = vadd.f32 0.0, %v1630
    %1632 = vmatmul.bf16.gmra.mxu0 %v349
    %v1633 = vpop.f32.mrf.mxu0
    %v1634 = vadd.f32 0.0, %v1633
    %v1635 = vpop.f32.mrf.mxu0
    %v1636 = vadd.f32 0.0, %v1635
    %1637 = vmatmul.bf16.gmra.mxu0 %v353
    %v1638 = vpop.f32.mrf.mxu0
    %v1639 = vadd.f32 0.0, %v1638
    %v1640 = vpop.f32.mrf.mxu0
    %v1641 = vadd.f32 0.0, %v1640
    %1642 = vdwg.mxu0
    %1643 = vmatpush.bf16.msra.mxu0 %v1045
    %1644 = vmatpush.bf16.msra.mxu0 %v1039
    %1645 = vmatpush.bf16.msra.mxu0 %v1033
    %1646 = vmatpush.bf16.msra.mxu0 %v1027
    %1647 = vmatpush.bf16.msra.mxu0 %v1021
    %1648 = vmatpush.bf16.msra.mxu0 %v1015
    %1649 = vmatpush.bf16.msra.mxu0 %v1009
    %1650 = vmatpush.bf16.msra.mxu0 %v1003
    %1651 = vmatmul.bf16.gmra.mxu0 %v338
    %v1652 = vpop.f32.mrf.mxu0
    %v1653 = vadd.f32 %v1619, %v1652
    %v1654 = vpop.f32.mrf.mxu0
    %v1655 = vadd.f32 %v1621, %v1654
    %1656 = vmatmul.bf16.gmra.mxu0 %v342
    %v1657 = vpop.f32.mrf.mxu0
    %v1658 = vadd.f32 %v1624, %v1657
    %v1659 = vpop.f32.mrf.mxu0
    %v1660 = vadd.f32 %v1626, %v1659
    %1661 = vmatmul.bf16.gmra.mxu0 %v346
    %v1662 = vpop.f32.mrf.mxu0
    %v1663 = vadd.f32 %v1629, %v1662
    %v1664 = vpop.f32.mrf.mxu0
    %v1665 = vadd.f32 %v1631, %v1664
    %1666 = vmatmul.bf16.gmra.mxu0 %v350
    %v1667 = vpop.f32.mrf.mxu0
    %v1668 = vadd.f32 %v1634, %v1667
    %v1669 = vpop.f32.mrf.mxu0
    %v1670 = vadd.f32 %v1636, %v1669
    %1671 = vmatmul.bf16.gmra.mxu0 %v354
    %v1672 = vpop.f32.mrf.mxu0
    %v1673 = vadd.f32 %v1639, %v1672
    %v1674 = vpop.f32.mrf.mxu0
    %v1675 = vadd.f32 %v1641, %v1674
    %1676 = vdwg.mxu0
    %1677 = vmatpush.bf16.msra.mxu0 %v1093
    %1678 = vmatpush.bf16.msra.mxu0 %v1087
    %1679 = vmatpush.bf16.msra.mxu0 %v1081
    %1680 = vmatpush.bf16.msra.mxu0 %v1075
    %1681 = vmatpush.bf16.msra.mxu0 %v1069
    %1682 = vmatpush.bf16.msra.mxu0 %v1063
    %1683 = vmatpush.bf16.msra.mxu0 %v1057
    %1684 = vmatpush.bf16.msra.mxu0 %v1051
    %1685 = vmatmul.bf16.gmra.mxu0 %v339
    %v1686 = vpop.f32.mrf.mxu0
    %v1687 = vadd.f32 %v1653, %v1686
    %v1688 = vpop.f32.mrf.mxu0
    %v1689 = vadd.f32 %v1655, %v1688
    %1690 = vmatmul.bf16.gmra.mxu0 %v343
    %v1691 = vpop.f32.mrf.mxu0
    %v1692 = vadd.f32 %v1658, %v1691
    %v1693 = vpop.f32.mrf.mxu0
    %v1694 = vadd.f32 %v1660, %v1693
    %1695 = vmatmul.bf16.gmra.mxu0 %v347
    %v1696 = vpop.f32.mrf.mxu0
    %v1697 = vadd.f32 %v1663, %v1696
    %v1698 = vpop.f32.mrf.mxu0
    %v1699 = vadd.f32 %v1665, %v1698
    %1700 = vmatmul.bf16.gmra.mxu0 %v351
    %v1701 = vpop.f32.mrf.mxu0
    %v1702 = vadd.f32 %v1668, %v1701
    %v1703 = vpop.f32.mrf.mxu0
    %v1704 = vadd.f32 %v1670, %v1703
    %1705 = vmatmul.bf16.gmra.mxu0 %v355
    %v1706 = vpop.f32.mrf.mxu0
    %v1707 = vadd.f32 %v1673, %v1706
    %v1708 = vpop.f32.mrf.mxu0
    %v1709 = vadd.f32 %v1675, %v1708
    %1710 = vdwg.mxu0
    %1711 = vmatpush.bf16.msra.mxu0 %v1141
    %1712 = vmatpush.bf16.msra.mxu0 %v1135
    %1713 = vmatpush.bf16.msra.mxu0 %v1129
    %1714 = vmatpush.bf16.msra.mxu0 %v1123
    %1715 = vmatpush.bf16.msra.mxu0 %v1117
    %1716 = vmatpush.bf16.msra.mxu0 %v1111
    %1717 = vmatpush.bf16.msra.mxu0 %v1105
    %1718 = vmatpush.bf16.msra.mxu0 %v1099
    %1719 = vmatmul.bf16.gmra.mxu0 %v340
    %v1720 = vpop.f32.mrf.mxu0
    %v1721 = vadd.f32 %v1687, %v1720
    %v1722 = vpop.f32.mrf.mxu0
    %v1723 = vadd.f32 %v1689, %v1722
    %1724 = vmatmul.bf16.gmra.mxu0 %v344
    %v1725 = vpop.f32.mrf.mxu0
    %v1726 = vadd.f32 %v1692, %v1725
    %v1727 = vpop.f32.mrf.mxu0
    %v1728 = vadd.f32 %v1694, %v1727
    %1729 = vmatmul.bf16.gmra.mxu0 %v348
    %v1730 = vpop.f32.mrf.mxu0
    %v1731 = vadd.f32 %v1697, %v1730
    %v1732 = vpop.f32.mrf.mxu0
    %v1733 = vadd.f32 %v1699, %v1732
    %1734 = vmatmul.bf16.gmra.mxu0 %v352
    %v1735 = vpop.f32.mrf.mxu0
    %v1736 = vadd.f32 %v1702, %v1735
    %v1737 = vpop.f32.mrf.mxu0
    %v1738 = vadd.f32 %v1704, %v1737
    %1739 = vmatmul.bf16.gmra.mxu0 %v356
    %v1740 = vpop.f32.mrf.mxu0
    %v1741 = vadd.f32 %v1707, %v1740
    %v1742 = vpop.f32.mrf.mxu0
    %v1743 = vadd.f32 %v1709, %v1742
    %1744 = vdwg.mxu0
    %1745 = vmatpush.bf16.msra.mxu0 %v998
    %1746 = vmatpush.bf16.msra.mxu0 %v992
    %1747 = vmatpush.bf16.msra.mxu0 %v986
    %1748 = vmatpush.bf16.msra.mxu0 %v980
    %1749 = vmatpush.bf16.msra.mxu0 %v974
    %1750 = vmatpush.bf16.msra.mxu0 %v968
    %1751 = vmatpush.bf16.msra.mxu0 %v962
    %1752 = vmatpush.bf16.msra.mxu0 %v956
    %1753 = vmatmul.bf16.gmra.mxu0 %v337
    %v1754 = vpop.f32.mrf.mxu0
    %v1755 = vadd.f32 0.0, %v1754
    %v1756 = vpop.f32.mrf.mxu0
    %v1757 = vadd.f32 0.0, %v1756
    %1758 = vmatmul.bf16.gmra.mxu0 %v341
    %v1759 = vpop.f32.mrf.mxu0
    %v1760 = vadd.f32 0.0, %v1759
    %v1761 = vpop.f32.mrf.mxu0
    %v1762 = vadd.f32 0.0, %v1761
    %1763 = vmatmul.bf16.gmra.mxu0 %v345
    %v1764 = vpop.f32.mrf.mxu0
    %v1765 = vadd.f32 0.0, %v1764
    %v1766 = vpop.f32.mrf.mxu0
    %v1767 = vadd.f32 0.0, %v1766
    %1768 = vmatmul.bf16.gmra.mxu0 %v349
    %v1769 = vpop.f32.mrf.mxu0
    %v1770 = vadd.f32 0.0, %v1769
    %v1771 = vpop.f32.mrf.mxu0
    %v1772 = vadd.f32 0.0, %v1771
    %1773 = vmatmul.bf16.gmra.mxu0 %v353
    %v1774 = vpop.f32.mrf.mxu0
    %v1775 = vadd.f32 0.0, %v1774
    %v1776 = vpop.f32.mrf.mxu0
    %v1777 = vadd.f32 0.0, %v1776
    %1778 = vdwg.mxu0
    %1779 = vmatpush.bf16.msra.mxu0 %v1046
    %1780 = vmatpush.bf16.msra.mxu0 %v1040
    %1781 = vmatpush.bf16.msra.mxu0 %v1034
    %1782 = vmatpush.bf16.msra.mxu0 %v1028
    %1783 = vmatpush.bf16.msra.mxu0 %v1022
    %1784 = vmatpush.bf16.msra.mxu0 %v1016
    %1785 = vmatpush.bf16.msra.mxu0 %v1010
    %1786 = vmatpush.bf16.msra.mxu0 %v1004
    %1787 = vmatmul.bf16.gmra.mxu0 %v338
    %v1788 = vpop.f32.mrf.mxu0
    %v1789 = vadd.f32 %v1755, %v1788
    %v1790 = vpop.f32.mrf.mxu0
    %v1791 = vadd.f32 %v1757, %v1790
    %1792 = vmatmul.bf16.gmra.mxu0 %v342
    %v1793 = vpop.f32.mrf.mxu0
    %v1794 = vadd.f32 %v1760, %v1793
    %v1795 = vpop.f32.mrf.mxu0
    %v1796 = vadd.f32 %v1762, %v1795
    %1797 = vmatmul.bf16.gmra.mxu0 %v346
    %v1798 = vpop.f32.mrf.mxu0
    %v1799 = vadd.f32 %v1765, %v1798
    %v1800 = vpop.f32.mrf.mxu0
    %v1801 = vadd.f32 %v1767, %v1800
    %1802 = vmatmul.bf16.gmra.mxu0 %v350
    %v1803 = vpop.f32.mrf.mxu0
    %v1804 = vadd.f32 %v1770, %v1803
    %v1805 = vpop.f32.mrf.mxu0
    %v1806 = vadd.f32 %v1772, %v1805
    %1807 = vmatmul.bf16.gmra.mxu0 %v354
    %v1808 = vpop.f32.mrf.mxu0
    %v1809 = vadd.f32 %v1775, %v1808
    %v1810 = vpop.f32.mrf.mxu0
    %v1811 = vadd.f32 %v1777, %v1810
    %1812 = vdwg.mxu0
    %1813 = vmatpush.bf16.msra.mxu0 %v1094
    %1814 = vmatpush.bf16.msra.mxu0 %v1088
    %1815 = vmatpush.bf16.msra.mxu0 %v1082
    %1816 = vmatpush.bf16.msra.mxu0 %v1076
    %1817 = vmatpush.bf16.msra.mxu0 %v1070
    %1818 = vmatpush.bf16.msra.mxu0 %v1064
    %1819 = vmatpush.bf16.msra.mxu0 %v1058
    %1820 = vmatpush.bf16.msra.mxu0 %v1052
    %1821 = vmatmul.bf16.gmra.mxu0 %v339
    %v1822 = vpop.f32.mrf.mxu0
    %v1823 = vadd.f32 %v1789, %v1822
    %v1824 = vpop.f32.mrf.mxu0
    %v1825 = vadd.f32 %v1791, %v1824
    %1826 = vmatmul.bf16.gmra.mxu0 %v343
    %v1827 = vpop.f32.mrf.mxu0
    %v1828 = vadd.f32 %v1794, %v1827
    %v1829 = vpop.f32.mrf.mxu0
    %v1830 = vadd.f32 %v1796, %v1829
    %1831 = vmatmul.bf16.gmra.mxu0 %v347
    %v1832 = vpop.f32.mrf.mxu0
    %v1833 = vadd.f32 %v1799, %v1832
    %v1834 = vpop.f32.mrf.mxu0
    %v1835 = vadd.f32 %v1801, %v1834
    %1836 = vmatmul.bf16.gmra.mxu0 %v351
    %v1837 = vpop.f32.mrf.mxu0
    %v1838 = vadd.f32 %v1804, %v1837
    %v1839 = vpop.f32.mrf.mxu0
    %v1840 = vadd.f32 %v1806, %v1839
    %1841 = vmatmul.bf16.gmra.mxu0 %v355
    %v1842 = vpop.f32.mrf.mxu0
    %v1843 = vadd.f32 %v1809, %v1842
    %v1844 = vpop.f32.mrf.mxu0
    %v1845 = vadd.f32 %v1811, %v1844
    %1846 = vdwg.mxu0
    %1847 = vmatpush.bf16.msra.mxu0 %v1142
    %1848 = vmatpush.bf16.msra.mxu0 %v1136
    %1849 = vmatpush.bf16.msra.mxu0 %v1130
    %1850 = vmatpush.bf16.msra.mxu0 %v1124
    %1851 = vmatpush.bf16.msra.mxu0 %v1118
    %1852 = vmatpush.bf16.msra.mxu0 %v1112
    %1853 = vmatpush.bf16.msra.mxu0 %v1106
    %1854 = vmatpush.bf16.msra.mxu0 %v1100
    %1855 = vmatmul.bf16.gmra.mxu0 %v340
    %v1856 = vpop.f32.mrf.mxu0
    %v1857 = vadd.f32 %v1823, %v1856
    %v1858 = vpop.f32.mrf.mxu0
    %v1859 = vadd.f32 %v1825, %v1858
    %1860 = vmatmul.bf16.gmra.mxu0 %v344
    %v1861 = vpop.f32.mrf.mxu0
    %v1862 = vadd.f32 %v1828, %v1861
    %v1863 = vpop.f32.mrf.mxu0
    %v1864 = vadd.f32 %v1830, %v1863
    %1865 = vmatmul.bf16.gmra.mxu0 %v348
    %v1866 = vpop.f32.mrf.mxu0
    %v1867 = vadd.f32 %v1833, %v1866
    %v1868 = vpop.f32.mrf.mxu0
    %v1869 = vadd.f32 %v1835, %v1868
    %1870 = vmatmul.bf16.gmra.mxu0 %v352
    %v1871 = vpop.f32.mrf.mxu0
    %v1872 = vadd.f32 %v1838, %v1871
    %v1873 = vpop.f32.mrf.mxu0
    %v1874 = vadd.f32 %v1840, %v1873
    %1875 = vmatmul.bf16.gmra.mxu0 %v356
    %v1876 = vpop.f32.mrf.mxu0
    %v1877 = vadd.f32 %v1843, %v1876
    %v1878 = vpop.f32.mrf.mxu0
    %v1879 = vadd.f32 %v1845, %v1878
    %1880 = vdwg.mxu0
    %1881 = vmatpush.bf16.msra.mxu0 %v999
    %1882 = vmatpush.bf16.msra.mxu0 %v993
    %1883 = vmatpush.bf16.msra.mxu0 %v987
    %1884 = vmatpush.bf16.msra.mxu0 %v981
    %1885 = vmatpush.bf16.msra.mxu0 %v975
    %1886 = vmatpush.bf16.msra.mxu0 %v969
    %1887 = vmatpush.bf16.msra.mxu0 %v963
    %1888 = vmatpush.bf16.msra.mxu0 %v957
    %1889 = vmatmul.bf16.gmra.mxu0 %v337
    %v1890 = vpop.f32.mrf.mxu0
    %v1891 = vadd.f32 0.0, %v1890
    %v1892 = vpop.f32.mrf.mxu0
    %v1893 = vadd.f32 0.0, %v1892
    %1894 = vmatmul.bf16.gmra.mxu0 %v341
    %v1895 = vpop.f32.mrf.mxu0
    %v1896 = vadd.f32 0.0, %v1895
    %v1897 = vpop.f32.mrf.mxu0
    %v1898 = vadd.f32 0.0, %v1897
    %1899 = vmatmul.bf16.gmra.mxu0 %v345
    %v1900 = vpop.f32.mrf.mxu0
    %v1901 = vadd.f32 0.0, %v1900
    %v1902 = vpop.f32.mrf.mxu0
    %v1903 = vadd.f32 0.0, %v1902
    %1904 = vmatmul.bf16.gmra.mxu0 %v349
    %v1905 = vpop.f32.mrf.mxu0
    %v1906 = vadd.f32 0.0, %v1905
    %v1907 = vpop.f32.mrf.mxu0
    %v1908 = vadd.f32 0.0, %v1907
    %1909 = vmatmul.bf16.gmra.mxu0 %v353
    %v1910 = vpop.f32.mrf.mxu0
    %v1911 = vadd.f32 0.0, %v1910
    %v1912 = vpop.f32.mrf.mxu0
    %v1913 = vadd.f32 0.0, %v1912
    %1914 = vdwg.mxu0
    %1915 = vmatpush.bf16.msra.mxu0 %v1047
    %1916 = vmatpush.bf16.msra.mxu0 %v1041
    %1917 = vmatpush.bf16.msra.mxu0 %v1035
    %1918 = vmatpush.bf16.msra.mxu0 %v1029
    %1919 = vmatpush.bf16.msra.mxu0 %v1023
    %1920 = vmatpush.bf16.msra.mxu0 %v1017
    %1921 = vmatpush.bf16.msra.mxu0 %v1011
    %1922 = vmatpush.bf16.msra.mxu0 %v1005
    %1923 = vmatmul.bf16.gmra.mxu0 %v338
    %v1924 = vpop.f32.mrf.mxu0
    %v1925 = vadd.f32 %v1891, %v1924
    %v1926 = vpop.f32.mrf.mxu0
    %v1927 = vadd.f32 %v1893, %v1926
    %1928 = vmatmul.bf16.gmra.mxu0 %v342
    %v1929 = vpop.f32.mrf.mxu0
    %v1930 = vadd.f32 %v1896, %v1929
    %v1931 = vpop.f32.mrf.mxu0
    %v1932 = vadd.f32 %v1898, %v1931
    %1933 = vmatmul.bf16.gmra.mxu0 %v346
    %v1934 = vpop.f32.mrf.mxu0
    %v1935 = vadd.f32 %v1901, %v1934
    %v1936 = vpop.f32.mrf.mxu0
    %v1937 = vadd.f32 %v1903, %v1936
    %1938 = vmatmul.bf16.gmra.mxu0 %v350
    %v1939 = vpop.f32.mrf.mxu0
    %v1940 = vadd.f32 %v1906, %v1939
    %v1941 = vpop.f32.mrf.mxu0
    %v1942 = vadd.f32 %v1908, %v1941
    %1943 = vmatmul.bf16.gmra.mxu0 %v354
    %v1944 = vpop.f32.mrf.mxu0
    %v1945 = vadd.f32 %v1911, %v1944
    %v1946 = vpop.f32.mrf.mxu0
    %v1947 = vadd.f32 %v1913, %v1946
    %1948 = vdwg.mxu0
    %1949 = vmatpush.bf16.msra.mxu0 %v1095
    %1950 = vmatpush.bf16.msra.mxu0 %v1089
    %1951 = vmatpush.bf16.msra.mxu0 %v1083
    %1952 = vmatpush.bf16.msra.mxu0 %v1077
    %1953 = vmatpush.bf16.msra.mxu0 %v1071
    %1954 = vmatpush.bf16.msra.mxu0 %v1065
    %1955 = vmatpush.bf16.msra.mxu0 %v1059
    %1956 = vmatpush.bf16.msra.mxu0 %v1053
    %1957 = vmatmul.bf16.gmra.mxu0 %v339
    %v1958 = vpop.f32.mrf.mxu0
    %v1959 = vadd.f32 %v1925, %v1958
    %v1960 = vpop.f32.mrf.mxu0
    %v1961 = vadd.f32 %v1927, %v1960
    %1962 = vmatmul.bf16.gmra.mxu0 %v343
    %v1963 = vpop.f32.mrf.mxu0
    %v1964 = vadd.f32 %v1930, %v1963
    %v1965 = vpop.f32.mrf.mxu0
    %v1966 = vadd.f32 %v1932, %v1965
    %1967 = vmatmul.bf16.gmra.mxu0 %v347
    %v1968 = vpop.f32.mrf.mxu0
    %v1969 = vadd.f32 %v1935, %v1968
    %v1970 = vpop.f32.mrf.mxu0
    %v1971 = vadd.f32 %v1937, %v1970
    %1972 = vmatmul.bf16.gmra.mxu0 %v351
    %v1973 = vpop.f32.mrf.mxu0
    %v1974 = vadd.f32 %v1940, %v1973
    %v1975 = vpop.f32.mrf.mxu0
    %v1976 = vadd.f32 %v1942, %v1975
    %1977 = vmatmul.bf16.gmra.mxu0 %v355
    %v1978 = vpop.f32.mrf.mxu0
    %v1979 = vadd.f32 %v1945, %v1978
    %v1980 = vpop.f32.mrf.mxu0
    %v1981 = vadd.f32 %v1947, %v1980
    %1982 = vdwg.mxu0
    %1983 = vmatpush.bf16.msra.mxu0 %v1143
    %1984 = vmatpush.bf16.msra.mxu0 %v1137
    %1985 = vmatpush.bf16.msra.mxu0 %v1131
    %1986 = vmatpush.bf16.msra.mxu0 %v1125
    %1987 = vmatpush.bf16.msra.mxu0 %v1119
    %1988 = vmatpush.bf16.msra.mxu0 %v1113
    %1989 = vmatpush.bf16.msra.mxu0 %v1107
    %1990 = vmatpush.bf16.msra.mxu0 %v1101
    %1991 = vmatmul.bf16.gmra.mxu0 %v340
    %v1992 = vpop.f32.mrf.mxu0
    %v1993 = vadd.f32 %v1959, %v1992
    %v1994 = vpop.f32.mrf.mxu0
    %v1995 = vadd.f32 %v1961, %v1994
    %1996 = vmatmul.bf16.gmra.mxu0 %v344
    %v1997 = vpop.f32.mrf.mxu0
    %v1998 = vadd.f32 %v1964, %v1997
    %v1999 = vpop.f32.mrf.mxu0
    %v2000 = vadd.f32 %v1966, %v1999
    %2001 = vmatmul.bf16.gmra.mxu0 %v348
    %v2002 = vpop.f32.mrf.mxu0
    %v2003 = vadd.f32 %v1969, %v2002
    %v2004 = vpop.f32.mrf.mxu0
    %v2005 = vadd.f32 %v1971, %v2004
    %2006 = vmatmul.bf16.gmra.mxu0 %v352
    %v2007 = vpop.f32.mrf.mxu0
    %v2008 = vadd.f32 %v1974, %v2007
    %v2009 = vpop.f32.mrf.mxu0
    %v2010 = vadd.f32 %v1976, %v2009
    %2011 = vmatmul.bf16.gmra.mxu0 %v356
    %v2012 = vpop.f32.mrf.mxu0
    %v2013 = vadd.f32 %v1979, %v2012
    %v2014 = vpop.f32.mrf.mxu0
    %v2015 = vadd.f32 %v1981, %v2014
    %2016 = vdwg.mxu0
    %2017 = vmatpush.bf16.msra.mxu0 %v1000
    %2018 = vmatpush.bf16.msra.mxu0 %v994
    %2019 = vmatpush.bf16.msra.mxu0 %v988
    %2020 = vmatpush.bf16.msra.mxu0 %v982
    %2021 = vmatpush.bf16.msra.mxu0 %v976
    %2022 = vmatpush.bf16.msra.mxu0 %v970
    %2023 = vmatpush.bf16.msra.mxu0 %v964
    %2024 = vmatpush.bf16.msra.mxu0 %v958
    %2025 = vmatmul.bf16.gmra.mxu0 %v337
    %v2026 = vpop.f32.mrf.mxu0
    %v2027 = vadd.f32 0.0, %v2026
    %v2028 = vpop.f32.mrf.mxu0
    %v2029 = vadd.f32 0.0, %v2028
    %2030 = vmatmul.bf16.gmra.mxu0 %v341
    %v2031 = vpop.f32.mrf.mxu0
    %v2032 = vadd.f32 0.0, %v2031
    %v2033 = vpop.f32.mrf.mxu0
    %v2034 = vadd.f32 0.0, %v2033
    %2035 = vmatmul.bf16.gmra.mxu0 %v345
    %v2036 = vpop.f32.mrf.mxu0
    %v2037 = vadd.f32 0.0, %v2036
    %v2038 = vpop.f32.mrf.mxu0
    %v2039 = vadd.f32 0.0, %v2038
    %2040 = vmatmul.bf16.gmra.mxu0 %v349
    %v2041 = vpop.f32.mrf.mxu0
    %v2042 = vadd.f32 0.0, %v2041
    %v2043 = vpop.f32.mrf.mxu0
    %v2044 = vadd.f32 0.0, %v2043
    %2045 = vmatmul.bf16.gmra.mxu0 %v353
    %v2046 = vpop.f32.mrf.mxu0
    %v2047 = vadd.f32 0.0, %v2046
    %v2048 = vpop.f32.mrf.mxu0
    %v2049 = vadd.f32 0.0, %v2048
    %2050 = vdwg.mxu0
    %2051 = vmatpush.bf16.msra.mxu0 %v1048
    %2052 = vmatpush.bf16.msra.mxu0 %v1042
    %2053 = vmatpush.bf16.msra.mxu0 %v1036
    %2054 = vmatpush.bf16.msra.mxu0 %v1030
    %2055 = vmatpush.bf16.msra.mxu0 %v1024
    %2056 = vmatpush.bf16.msra.mxu0 %v1018
    %2057 = vmatpush.bf16.msra.mxu0 %v1012
    %2058 = vmatpush.bf16.msra.mxu0 %v1006
    %2059 = vmatmul.bf16.gmra.mxu0 %v338
    %v2060 = vpop.f32.mrf.mxu0
    %v2061 = vadd.f32 %v2027, %v2060
    %v2062 = vpop.f32.mrf.mxu0
    %v2063 = vadd.f32 %v2029, %v2062
    %2064 = vmatmul.bf16.gmra.mxu0 %v342
    %v2065 = vpop.f32.mrf.mxu0
    %v2066 = vadd.f32 %v2032, %v2065
    %v2067 = vpop.f32.mrf.mxu0
    %v2068 = vadd.f32 %v2034, %v2067
    %2069 = vmatmul.bf16.gmra.mxu0 %v346
    %v2070 = vpop.f32.mrf.mxu0
    %v2071 = vadd.f32 %v2037, %v2070
    %v2072 = vpop.f32.mrf.mxu0
    %v2073 = vadd.f32 %v2039, %v2072
    %2074 = vmatmul.bf16.gmra.mxu0 %v350
    %v2075 = vpop.f32.mrf.mxu0
    %v2076 = vadd.f32 %v2042, %v2075
    %v2077 = vpop.f32.mrf.mxu0
    %v2078 = vadd.f32 %v2044, %v2077
    %2079 = vmatmul.bf16.gmra.mxu0 %v354
    %v2080 = vpop.f32.mrf.mxu0
    %v2081 = vadd.f32 %v2047, %v2080
    %v2082 = vpop.f32.mrf.mxu0
    %v2083 = vadd.f32 %v2049, %v2082
    %2084 = vdwg.mxu0
    %2085 = vmatpush.bf16.msra.mxu0 %v1096
    %2086 = vmatpush.bf16.msra.mxu0 %v1090
    %2087 = vmatpush.bf16.msra.mxu0 %v1084
    %2088 = vmatpush.bf16.msra.mxu0 %v1078
    %2089 = vmatpush.bf16.msra.mxu0 %v1072
    %2090 = vmatpush.bf16.msra.mxu0 %v1066
    %2091 = vmatpush.bf16.msra.mxu0 %v1060
    %2092 = vmatpush.bf16.msra.mxu0 %v1054
    %2093 = vmatmul.bf16.gmra.mxu0 %v339
    %v2094 = vpop.f32.mrf.mxu0
    %v2095 = vadd.f32 %v2061, %v2094
    %v2096 = vpop.f32.mrf.mxu0
    %v2097 = vadd.f32 %v2063, %v2096
    %2098 = vmatmul.bf16.gmra.mxu0 %v343
    %v2099 = vpop.f32.mrf.mxu0
    %v2100 = vadd.f32 %v2066, %v2099
    %v2101 = vpop.f32.mrf.mxu0
    %v2102 = vadd.f32 %v2068, %v2101
    %2103 = vmatmul.bf16.gmra.mxu0 %v347
    %v2104 = vpop.f32.mrf.mxu0
    %v2105 = vadd.f32 %v2071, %v2104
    %v2106 = vpop.f32.mrf.mxu0
    %v2107 = vadd.f32 %v2073, %v2106
    %2108 = vmatmul.bf16.gmra.mxu0 %v351
    %v2109 = vpop.f32.mrf.mxu0
    %v2110 = vadd.f32 %v2076, %v2109
    %v2111 = vpop.f32.mrf.mxu0
    %v2112 = vadd.f32 %v2078, %v2111
    %2113 = vmatmul.bf16.gmra.mxu0 %v355
    %v2114 = vpop.f32.mrf.mxu0
    %v2115 = vadd.f32 %v2081, %v2114
    %v2116 = vpop.f32.mrf.mxu0
    %v2117 = vadd.f32 %v2083, %v2116
    %2118 = vdwg.mxu0
    %2119 = vmatpush.bf16.msra.mxu0 %v1144
    %2120 = vmatpush.bf16.msra.mxu0 %v1138
    %2121 = vmatpush.bf16.msra.mxu0 %v1132
    %2122 = vmatpush.bf16.msra.mxu0 %v1126
    %2123 = vmatpush.bf16.msra.mxu0 %v1120
    %2124 = vmatpush.bf16.msra.mxu0 %v1114
    %2125 = vmatpush.bf16.msra.mxu0 %v1108
    %2126 = vmatpush.bf16.msra.mxu0 %v1102
    %2127 = vmatmul.bf16.gmra.mxu0 %v340
    %v2128 = vpop.f32.mrf.mxu0
    %v2129 = vadd.f32 %v2095, %v2128
    %v2130 = vpop.f32.mrf.mxu0
    %v2131 = vadd.f32 %v2097, %v2130
    %2132 = vmatmul.bf16.gmra.mxu0 %v344
    %v2133 = vpop.f32.mrf.mxu0
    %v2134 = vadd.f32 %v2100, %v2133
    %v2135 = vpop.f32.mrf.mxu0
    %v2136 = vadd.f32 %v2102, %v2135
    %2137 = vmatmul.bf16.gmra.mxu0 %v348
    %v2138 = vpop.f32.mrf.mxu0
    %v2139 = vadd.f32 %v2105, %v2138
    %v2140 = vpop.f32.mrf.mxu0
    %v2141 = vadd.f32 %v2107, %v2140
    %2142 = vmatmul.bf16.gmra.mxu0 %v352
    %v2143 = vpop.f32.mrf.mxu0
    %v2144 = vadd.f32 %v2110, %v2143
    %v2145 = vpop.f32.mrf.mxu0
    %v2146 = vadd.f32 %v2112, %v2145
    %2147 = vmatmul.bf16.gmra.mxu0 %v356
    %v2148 = vpop.f32.mrf.mxu0
    %v2149 = vadd.f32 %v2115, %v2148
    %v2150 = vpop.f32.mrf.mxu0
    %v2151 = vadd.f32 %v2117, %v2150
    %2152 = vdwg.mxu0
    %v2153 = vmul.f32 %v1449, %v1449
    %v2154 = vmul.f32 %v1585, %v1585
    %v2155 = vmul.f32 %v1721, %v1721
    %v2156 = vmul.f32 %v1451, %v1451
    %v2157 = vmul.f32 %v1587, %v1587
    %v2158 = vmul.f32 %v1723, %v1723
    %v2159 = vmul.f32 %v1454, %v1454
    %v2160 = vmul.f32 %v1590, %v1590
    %v2161 = vmul.f32 %v1726, %v1726
    %v2162 = vmul.f32 %v1456, %v1456
    %v2163 = vmul.f32 %v1592, %v1592
    %v2164 = vmul.f32 %v1728, %v1728
    %v2165 = vmul.f32 %v1459, %v1459
    %v2166 = vmul.f32 %v1595, %v1595
    %v2167 = vmul.f32 %v1731, %v1731
    %v2168 = vmul.f32 %v1461, %v1461
    %v2169 = vmul.f32 %v1597, %v1597
    %v2170 = vmul.f32 %v1733, %v1733
    %v2171 = vmul.f32 %v1464, %v1464
    %v2172 = vmul.f32 %v1600, %v1600
    %v2173 = vmul.f32 %v1736, %v1736
    %v2174 = vmul.f32 %v1466, %v1466
    %v2175 = vmul.f32 %v1602, %v1602
    %v2176 = vmul.f32 %v1738, %v1738
    %v2177 = vmul.f32 %v1469, %v1469
    %v2178 = vmul.f32 %v1605, %v1605
    %v2179 = vmul.f32 %v1741, %v1741
    %v2180 = vmul.f32 %v1471, %v1471
    %v2181 = vmul.f32 %v1607, %v1607
    %v2182 = vmul.f32 %v1743, %v1743
    %v2183 = vmul.f32 %v1857, %v1857
    %v2184 = vmul.f32 %v1993, %v1993
    %v2185 = vmul.f32 %v2129, %v2129
    %v2186 = vmul.f32 %v1859, %v1859
    %v2187 = vmul.f32 %v1995, %v1995
    %v2188 = vmul.f32 %v2131, %v2131
    %v2189 = vmul.f32 %v1862, %v1862
    %v2190 = vmul.f32 %v1998, %v1998
    %v2191 = vmul.f32 %v2134, %v2134
    %v2192 = vmul.f32 %v1864, %v1864
    %v2193 = vmul.f32 %v2000, %v2000
    %v2194 = vmul.f32 %v2136, %v2136
    %v2195 = vmul.f32 %v1867, %v1867
    %v2196 = vmul.f32 %v2003, %v2003
    %v2197 = vmul.f32 %v2139, %v2139
    %v2198 = vmul.f32 %v1869, %v1869
    %v2199 = vmul.f32 %v2005, %v2005
    %v2200 = vmul.f32 %v2141, %v2141
    %v2201 = vmul.f32 %v1872, %v1872
    %v2202 = vmul.f32 %v2008, %v2008
    %v2203 = vmul.f32 %v2144, %v2144
    %v2204 = vmul.f32 %v1874, %v1874
    %v2205 = vmul.f32 %v2010, %v2010
    %v2206 = vmul.f32 %v2146, %v2146
    %v2207 = vmul.f32 %v1877, %v1877
    %v2208 = vmul.f32 %v2013, %v2013
    %v2209 = vmul.f32 %v2149, %v2149
    %v2210 = vmul.f32 %v1879, %v1879
    %v2211 = vmul.f32 %v2015, %v2015
    %v2212 = vmul.f32 %v2151, %v2151
    %v2213 = vadd.f32 %v2153, %v2183
    %v2214 = vadd.f32 %v2154, %v2184
    %v2215 = vadd.f32 %v2155, %v2185
    %v2216 = vadd.f32 %v2156, %v2186
    %v2217 = vadd.f32 %v2157, %v2187
    %v2218 = vadd.f32 %v2158, %v2188
    %v2219 = vadd.f32 %v2159, %v2189
    %v2220 = vadd.f32 %v2160, %v2190
    %v2221 = vadd.f32 %v2161, %v2191
    %v2222 = vadd.f32 %v2162, %v2192
    %v2223 = vadd.f32 %v2163, %v2193
    %v2224 = vadd.f32 %v2164, %v2194
    %v2225 = vadd.f32 %v2165, %v2195
    %v2226 = vadd.f32 %v2166, %v2196
    %v2227 = vadd.f32 %v2167, %v2197
    %v2228 = vadd.f32 %v2168, %v2198
    %v2229 = vadd.f32 %v2169, %v2199
    %v2230 = vadd.f32 %v2170, %v2200
    %v2231 = vadd.f32 %v2171, %v2201
    %v2232 = vadd.f32 %v2172, %v2202
    %v2233 = vadd.f32 %v2173, %v2203
    %v2234 = vadd.f32 %v2174, %v2204
    %v2235 = vadd.f32 %v2175, %v2205
    %v2236 = vadd.f32 %v2176, %v2206
    %v2237 = vadd.f32 %v2177, %v2207
    %v2238 = vadd.f32 %v2178, %v2208
    %v2239 = vadd.f32 %v2179, %v2209
    %v2240 = vadd.f32 %v2180, %v2210
    %v2241 = vadd.f32 %v2181, %v2211
    %v2242 = vadd.f32 %v2182, %v2212
    %v2243 = vrsqrt.pop %v2213
    %v2244 = vmul.f32 %v2243, %v2213
    %v2245 = vmul.f32 %v2244, %v2243
    %v2246 = vmul.f32 0.5, %v2245
    %v2247 = vsub.f32 1.5, %v2246
    %v2248 = vmul.f32 %v2243, %v2247
    %v2249 = vmul.f32 %v2213, %v2248
    %vm2250 = vcmp.eq.f32.partialorder %v2213, inf
    %v2251 = vsel %vm2250, %v2213, %v2249
    %vm2252 = vcmp.eq.f32.partialorder %v2213, 0.0
    %v2253 = vand.u32 %v2213, 2147483648
    %v2254 = vsel %vm2252, %v2253, %v2251
    %v2255 = vrsqrt.pop %v2214
    %v2256 = vmul.f32 %v2255, %v2214
    %v2257 = vmul.f32 %v2256, %v2255
    %v2258 = vmul.f32 0.5, %v2257
    %v2259 = vsub.f32 1.5, %v2258
    %v2260 = vmul.f32 %v2255, %v2259
    %v2261 = vmul.f32 %v2214, %v2260
    %vm2262 = vcmp.eq.f32.partialorder %v2214, inf
    %v2263 = vsel %vm2262, %v2214, %v2261
    %vm2264 = vcmp.eq.f32.partialorder %v2214, 0.0
    %v2265 = vand.u32 %v2214, 2147483648
    %v2266 = vsel %vm2264, %v2265, %v2263
    %v2267 = vrsqrt.pop %v2215
    %v2268 = vmul.f32 %v2267, %v2215
    %v2269 = vmul.f32 %v2268, %v2267
    %v2270 = vmul.f32 0.5, %v2269
    %v2271 = vsub.f32 1.5, %v2270
    %v2272 = vmul.f32 %v2267, %v2271
    %v2273 = vmul.f32 %v2215, %v2272
    %vm2274 = vcmp.eq.f32.partialorder %v2215, inf
    %v2275 = vsel %vm2274, %v2215, %v2273
    %vm2276 = vcmp.eq.f32.partialorder %v2215, 0.0
    %v2277 = vand.u32 %v2215, 2147483648
    %v2278 = vsel %vm2276, %v2277, %v2275
    %v2279 = vrsqrt.pop %v2216
    %v2280 = vmul.f32 %v2279, %v2216
    %v2281 = vmul.f32 %v2280, %v2279
    %v2282 = vmul.f32 0.5, %v2281
    %v2283 = vsub.f32 1.5, %v2282
    %v2284 = vmul.f32 %v2279, %v2283
    %v2285 = vmul.f32 %v2216, %v2284
    %vm2286 = vcmp.eq.f32.partialorder %v2216, inf
    %v2287 = vsel %vm2286, %v2216, %v2285
    %vm2288 = vcmp.eq.f32.partialorder %v2216, 0.0
    %v2289 = vand.u32 %v2216, 2147483648
    %v2290 = vsel %vm2288, %v2289, %v2287
    %v2291 = vrsqrt.pop %v2217
    %v2292 = vmul.f32 %v2291, %v2217
    %v2293 = vmul.f32 %v2292, %v2291
    %v2294 = vmul.f32 0.5, %v2293
    %v2295 = vsub.f32 1.5, %v2294
    %v2296 = vmul.f32 %v2291, %v2295
    %v2297 = vmul.f32 %v2217, %v2296
    %vm2298 = vcmp.eq.f32.partialorder %v2217, inf
    %v2299 = vsel %vm2298, %v2217, %v2297
    %vm2300 = vcmp.eq.f32.partialorder %v2217, 0.0
    %v2301 = vand.u32 %v2217, 2147483648
    %v2302 = vsel %vm2300, %v2301, %v2299
    %v2303 = vrsqrt.pop %v2218
    %v2304 = vmul.f32 %v2303, %v2218
    %v2305 = vmul.f32 %v2304, %v2303
    %v2306 = vmul.f32 0.5, %v2305
    %v2307 = vsub.f32 1.5, %v2306
    %v2308 = vmul.f32 %v2303, %v2307
    %v2309 = vmul.f32 %v2218, %v2308
    %vm2310 = vcmp.eq.f32.partialorder %v2218, inf
    %v2311 = vsel %vm2310, %v2218, %v2309
    %vm2312 = vcmp.eq.f32.partialorder %v2218, 0.0
    %v2313 = vand.u32 %v2218, 2147483648
    %v2314 = vsel %vm2312, %v2313, %v2311
    %v2315 = vrsqrt.pop %v2219
    %v2316 = vmul.f32 %v2315, %v2219
    %v2317 = vmul.f32 %v2316, %v2315
    %v2318 = vmul.f32 0.5, %v2317
    %v2319 = vsub.f32 1.5, %v2318
    %v2320 = vmul.f32 %v2315, %v2319
    %v2321 = vmul.f32 %v2219, %v2320
    %vm2322 = vcmp.eq.f32.partialorder %v2219, inf
    %v2323 = vsel %vm2322, %v2219, %v2321
    %vm2324 = vcmp.eq.f32.partialorder %v2219, 0.0
    %v2325 = vand.u32 %v2219, 2147483648
    %v2326 = vsel %vm2324, %v2325, %v2323
    %v2327 = vrsqrt.pop %v2220
    %v2328 = vmul.f32 %v2327, %v2220
    %v2329 = vmul.f32 %v2328, %v2327
    %v2330 = vmul.f32 0.5, %v2329
    %v2331 = vsub.f32 1.5, %v2330
    %v2332 = vmul.f32 %v2327, %v2331
    %v2333 = vmul.f32 %v2220, %v2332
    %vm2334 = vcmp.eq.f32.partialorder %v2220, inf
    %v2335 = vsel %vm2334, %v2220, %v2333
    %vm2336 = vcmp.eq.f32.partialorder %v2220, 0.0
    %v2337 = vand.u32 %v2220, 2147483648
    %v2338 = vsel %vm2336, %v2337, %v2335
    %v2339 = vrsqrt.pop %v2221
    %v2340 = vmul.f32 %v2339, %v2221
    %v2341 = vmul.f32 %v2340, %v2339
    %v2342 = vmul.f32 0.5, %v2341
    %v2343 = vsub.f32 1.5, %v2342
    %v2344 = vmul.f32 %v2339, %v2343
    %v2345 = vmul.f32 %v2221, %v2344
    %vm2346 = vcmp.eq.f32.partialorder %v2221, inf
    %v2347 = vsel %vm2346, %v2221, %v2345
    %vm2348 = vcmp.eq.f32.partialorder %v2221, 0.0
    %v2349 = vand.u32 %v2221, 2147483648
    %v2350 = vsel %vm2348, %v2349, %v2347
    %v2351 = vrsqrt.pop %v2222
    %v2352 = vmul.f32 %v2351, %v2222
    %v2353 = vmul.f32 %v2352, %v2351
    %v2354 = vmul.f32 0.5, %v2353
    %v2355 = vsub.f32 1.5, %v2354
    %v2356 = vmul.f32 %v2351, %v2355
    %v2357 = vmul.f32 %v2222, %v2356
    %vm2358 = vcmp.eq.f32.partialorder %v2222, inf
    %v2359 = vsel %vm2358, %v2222, %v2357
    %vm2360 = vcmp.eq.f32.partialorder %v2222, 0.0
    %v2361 = vand.u32 %v2222, 2147483648
    %v2362 = vsel %vm2360, %v2361, %v2359
    %v2363 = vrsqrt.pop %v2223
    %v2364 = vmul.f32 %v2363, %v2223
    %v2365 = vmul.f32 %v2364, %v2363
    %v2366 = vmul.f32 0.5, %v2365
    %v2367 = vsub.f32 1.5, %v2366
    %v2368 = vmul.f32 %v2363, %v2367
    %v2369 = vmul.f32 %v2223, %v2368
    %vm2370 = vcmp.eq.f32.partialorder %v2223, inf
    %v2371 = vsel %vm2370, %v2223, %v2369
    %vm2372 = vcmp.eq.f32.partialorder %v2223, 0.0
    %v2373 = vand.u32 %v2223, 2147483648
    %v2374 = vsel %vm2372, %v2373, %v2371
    %v2375 = vrsqrt.pop %v2224
    %v2376 = vmul.f32 %v2375, %v2224
    %v2377 = vmul.f32 %v2376, %v2375
    %v2378 = vmul.f32 0.5, %v2377
    %v2379 = vsub.f32 1.5, %v2378
    %v2380 = vmul.f32 %v2375, %v2379
    %v2381 = vmul.f32 %v2224, %v2380
    %vm2382 = vcmp.eq.f32.partialorder %v2224, inf
    %v2383 = vsel %vm2382, %v2224, %v2381
    %vm2384 = vcmp.eq.f32.partialorder %v2224, 0.0
    %v2385 = vand.u32 %v2224, 2147483648
    %v2386 = vsel %vm2384, %v2385, %v2383
    %v2387 = vrsqrt.pop %v2225
    %v2388 = vmul.f32 %v2387, %v2225
    %v2389 = vmul.f32 %v2388, %v2387
    %v2390 = vmul.f32 0.5, %v2389
    %v2391 = vsub.f32 1.5, %v2390
    %v2392 = vmul.f32 %v2387, %v2391
    %v2393 = vmul.f32 %v2225, %v2392
    %vm2394 = vcmp.eq.f32.partialorder %v2225, inf
    %v2395 = vsel %vm2394, %v2225, %v2393
    %vm2396 = vcmp.eq.f32.partialorder %v2225, 0.0
    %v2397 = vand.u32 %v2225, 2147483648
    %v2398 = vsel %vm2396, %v2397, %v2395
    %v2399 = vrsqrt.pop %v2226
    %v2400 = vmul.f32 %v2399, %v2226
    %v2401 = vmul.f32 %v2400, %v2399
    %v2402 = vmul.f32 0.5, %v2401
    %v2403 = vsub.f32 1.5, %v2402
    %v2404 = vmul.f32 %v2399, %v2403
    %v2405 = vmul.f32 %v2226, %v2404
    %vm2406 = vcmp.eq.f32.partialorder %v2226, inf
    %v2407 = vsel %vm2406, %v2226, %v2405
    %vm2408 = vcmp.eq.f32.partialorder %v2226, 0.0
    %v2409 = vand.u32 %v2226, 2147483648
    %v2410 = vsel %vm2408, %v2409, %v2407
    %v2411 = vrsqrt.pop %v2227
    %v2412 = vmul.f32 %v2411, %v2227
    %v2413 = vmul.f32 %v2412, %v2411
    %v2414 = vmul.f32 0.5, %v2413
    %v2415 = vsub.f32 1.5, %v2414
    %v2416 = vmul.f32 %v2411, %v2415
    %v2417 = vmul.f32 %v2227, %v2416
    %vm2418 = vcmp.eq.f32.partialorder %v2227, inf
    %v2419 = vsel %vm2418, %v2227, %v2417
    %vm2420 = vcmp.eq.f32.partialorder %v2227, 0.0
    %v2421 = vand.u32 %v2227, 2147483648
    %v2422 = vsel %vm2420, %v2421, %v2419
    %v2423 = vrsqrt.pop %v2228
    %v2424 = vmul.f32 %v2423, %v2228
    %v2425 = vmul.f32 %v2424, %v2423
    %v2426 = vmul.f32 0.5, %v2425
    %v2427 = vsub.f32 1.5, %v2426
    %v2428 = vmul.f32 %v2423, %v2427
    %v2429 = vmul.f32 %v2228, %v2428
    %vm2430 = vcmp.eq.f32.partialorder %v2228, inf
    %v2431 = vsel %vm2430, %v2228, %v2429
    %vm2432 = vcmp.eq.f32.partialorder %v2228, 0.0
    %v2433 = vand.u32 %v2228, 2147483648
    %v2434 = vsel %vm2432, %v2433, %v2431
    %v2435 = vrsqrt.pop %v2229
    %v2436 = vmul.f32 %v2435, %v2229
    %v2437 = vmul.f32 %v2436, %v2435
    %v2438 = vmul.f32 0.5, %v2437
    %v2439 = vsub.f32 1.5, %v2438
    %v2440 = vmul.f32 %v2435, %v2439
    %v2441 = vmul.f32 %v2229, %v2440
    %vm2442 = vcmp.eq.f32.partialorder %v2229, inf
    %v2443 = vsel %vm2442, %v2229, %v2441
    %vm2444 = vcmp.eq.f32.partialorder %v2229, 0.0
    %v2445 = vand.u32 %v2229, 2147483648
    %v2446 = vsel %vm2444, %v2445, %v2443
    %v2447 = vrsqrt.pop %v2230
    %v2448 = vmul.f32 %v2447, %v2230
    %v2449 = vmul.f32 %v2448, %v2447
    %v2450 = vmul.f32 0.5, %v2449
    %v2451 = vsub.f32 1.5, %v2450
    %v2452 = vmul.f32 %v2447, %v2451
    %v2453 = vmul.f32 %v2230, %v2452
    %vm2454 = vcmp.eq.f32.partialorder %v2230, inf
    %v2455 = vsel %vm2454, %v2230, %v2453
    %vm2456 = vcmp.eq.f32.partialorder %v2230, 0.0
    %v2457 = vand.u32 %v2230, 2147483648
    %v2458 = vsel %vm2456, %v2457, %v2455
    %v2459 = vrsqrt.pop %v2231
    %v2460 = vmul.f32 %v2459, %v2231
    %v2461 = vmul.f32 %v2460, %v2459
    %v2462 = vmul.f32 0.5, %v2461
    %v2463 = vsub.f32 1.5, %v2462
    %v2464 = vmul.f32 %v2459, %v2463
    %v2465 = vmul.f32 %v2231, %v2464
    %vm2466 = vcmp.eq.f32.partialorder %v2231, inf
    %v2467 = vsel %vm2466, %v2231, %v2465
    %vm2468 = vcmp.eq.f32.partialorder %v2231, 0.0
    %v2469 = vand.u32 %v2231, 2147483648
    %v2470 = vsel %vm2468, %v2469, %v2467
    %v2471 = vrsqrt.pop %v2232
    %v2472 = vmul.f32 %v2471, %v2232
    %v2473 = vmul.f32 %v2472, %v2471
    %v2474 = vmul.f32 0.5, %v2473
    %v2475 = vsub.f32 1.5, %v2474
    %v2476 = vmul.f32 %v2471, %v2475
    %v2477 = vmul.f32 %v2232, %v2476
    %vm2478 = vcmp.eq.f32.partialorder %v2232, inf
    %v2479 = vsel %vm2478, %v2232, %v2477
    %vm2480 = vcmp.eq.f32.partialorder %v2232, 0.0
    %v2481 = vand.u32 %v2232, 2147483648
    %v2482 = vsel %vm2480, %v2481, %v2479
    %v2483 = vrsqrt.pop %v2233
    %v2484 = vmul.f32 %v2483, %v2233
    %v2485 = vmul.f32 %v2484, %v2483
    %v2486 = vmul.f32 0.5, %v2485
    %v2487 = vsub.f32 1.5, %v2486
    %v2488 = vmul.f32 %v2483, %v2487
    %v2489 = vmul.f32 %v2233, %v2488
    %vm2490 = vcmp.eq.f32.partialorder %v2233, inf
    %v2491 = vsel %vm2490, %v2233, %v2489
    %vm2492 = vcmp.eq.f32.partialorder %v2233, 0.0
    %v2493 = vand.u32 %v2233, 2147483648
    %v2494 = vsel %vm2492, %v2493, %v2491
    %v2495 = vrsqrt.pop %v2234
    %v2496 = vmul.f32 %v2495, %v2234
    %v2497 = vmul.f32 %v2496, %v2495
    %v2498 = vmul.f32 0.5, %v2497
    %v2499 = vsub.f32 1.5, %v2498
    %v2500 = vmul.f32 %v2495, %v2499
    %v2501 = vmul.f32 %v2234, %v2500
    %vm2502 = vcmp.eq.f32.partialorder %v2234, inf
    %v2503 = vsel %vm2502, %v2234, %v2501
    %vm2504 = vcmp.eq.f32.partialorder %v2234, 0.0
    %v2505 = vand.u32 %v2234, 2147483648
    %v2506 = vsel %vm2504, %v2505, %v2503
    %v2507 = vrsqrt.pop %v2235
    %v2508 = vmul.f32 %v2507, %v2235
    %v2509 = vmul.f32 %v2508, %v2507
    %v2510 = vmul.f32 0.5, %v2509
    %v2511 = vsub.f32 1.5, %v2510
    %v2512 = vmul.f32 %v2507, %v2511
    %v2513 = vmul.f32 %v2235, %v2512
    %vm2514 = vcmp.eq.f32.partialorder %v2235, inf
    %v2515 = vsel %vm2514, %v2235, %v2513
    %vm2516 = vcmp.eq.f32.partialorder %v2235, 0.0
    %v2517 = vand.u32 %v2235, 2147483648
    %v2518 = vsel %vm2516, %v2517, %v2515
    %v2519 = vrsqrt.pop %v2236
    %v2520 = vmul.f32 %v2519, %v2236
    %v2521 = vmul.f32 %v2520, %v2519
    %v2522 = vmul.f32 0.5, %v2521
    %v2523 = vsub.f32 1.5, %v2522
    %v2524 = vmul.f32 %v2519, %v2523
    %v2525 = vmul.f32 %v2236, %v2524
    %vm2526 = vcmp.eq.f32.partialorder %v2236, inf
    %v2527 = vsel %vm2526, %v2236, %v2525
    %vm2528 = vcmp.eq.f32.partialorder %v2236, 0.0
    %v2529 = vand.u32 %v2236, 2147483648
    %v2530 = vsel %vm2528, %v2529, %v2527
    %v2531 = vrsqrt.pop %v2237
    %v2532 = vmul.f32 %v2531, %v2237
    %v2533 = vmul.f32 %v2532, %v2531
    %v2534 = vmul.f32 0.5, %v2533
    %v2535 = vsub.f32 1.5, %v2534
    %v2536 = vmul.f32 %v2531, %v2535
    %v2537 = vmul.f32 %v2237, %v2536
    %vm2538 = vcmp.eq.f32.partialorder %v2237, inf
    %v2539 = vsel %vm2538, %v2237, %v2537
    %vm2540 = vcmp.eq.f32.partialorder %v2237, 0.0
    %v2541 = vand.u32 %v2237, 2147483648
    %v2542 = vsel %vm2540, %v2541, %v2539
    %v2543 = vrsqrt.pop %v2238
    %v2544 = vmul.f32 %v2543, %v2238
    %v2545 = vmul.f32 %v2544, %v2543
    %v2546 = vmul.f32 0.5, %v2545
    %v2547 = vsub.f32 1.5, %v2546
    %v2548 = vmul.f32 %v2543, %v2547
    %v2549 = vmul.f32 %v2238, %v2548
    %vm2550 = vcmp.eq.f32.partialorder %v2238, inf
    %v2551 = vsel %vm2550, %v2238, %v2549
    %vm2552 = vcmp.eq.f32.partialorder %v2238, 0.0
    %v2553 = vand.u32 %v2238, 2147483648
    %v2554 = vsel %vm2552, %v2553, %v2551
    %v2555 = vrsqrt.pop %v2239
    %v2556 = vmul.f32 %v2555, %v2239
    %v2557 = vmul.f32 %v2556, %v2555
    %v2558 = vmul.f32 0.5, %v2557
    %v2559 = vsub.f32 1.5, %v2558
    %v2560 = vmul.f32 %v2555, %v2559
    %v2561 = vmul.f32 %v2239, %v2560
    %vm2562 = vcmp.eq.f32.partialorder %v2239, inf
    %v2563 = vsel %vm2562, %v2239, %v2561
    %vm2564 = vcmp.eq.f32.partialorder %v2239, 0.0
    %v2565 = vand.u32 %v2239, 2147483648
    %v2566 = vsel %vm2564, %v2565, %v2563
    %v2567 = vrsqrt.pop %v2240
    %v2568 = vmul.f32 %v2567, %v2240
    %v2569 = vmul.f32 %v2568, %v2567
    %v2570 = vmul.f32 0.5, %v2569
    %v2571 = vsub.f32 1.5, %v2570
    %v2572 = vmul.f32 %v2567, %v2571
    %v2573 = vmul.f32 %v2240, %v2572
    %vm2574 = vcmp.eq.f32.partialorder %v2240, inf
    %v2575 = vsel %vm2574, %v2240, %v2573
    %vm2576 = vcmp.eq.f32.partialorder %v2240, 0.0
    %v2577 = vand.u32 %v2240, 2147483648
    %v2578 = vsel %vm2576, %v2577, %v2575
    %v2579 = vrsqrt.pop %v2241
    %v2580 = vmul.f32 %v2579, %v2241
    %v2581 = vmul.f32 %v2580, %v2579
    %v2582 = vmul.f32 0.5, %v2581
    %v2583 = vsub.f32 1.5, %v2582
    %v2584 = vmul.f32 %v2579, %v2583
    %v2585 = vmul.f32 %v2241, %v2584
    %vm2586 = vcmp.eq.f32.partialorder %v2241, inf
    %v2587 = vsel %vm2586, %v2241, %v2585
    %vm2588 = vcmp.eq.f32.partialorder %v2241, 0.0
    %v2589 = vand.u32 %v2241, 2147483648
    %v2590 = vsel %vm2588, %v2589, %v2587
    %v2591 = vrsqrt.pop %v2242
    %v2592 = vmul.f32 %v2591, %v2242
    %v2593 = vmul.f32 %v2592, %v2591
    %v2594 = vmul.f32 0.5, %v2593
    %v2595 = vsub.f32 1.5, %v2594
    %v2596 = vmul.f32 %v2591, %v2595
    %v2597 = vmul.f32 %v2242, %v2596
    %vm2598 = vcmp.eq.f32.partialorder %v2242, inf
    %v2599 = vsel %vm2598, %v2242, %v2597
    %vm2600 = vcmp.eq.f32.partialorder %v2242, 0.0
    %v2601 = vand.u32 %v2242, 2147483648
    %v2602 = vsel %vm2600, %v2601, %v2599
    %v2603 = vpack.c.bf16 %v2290, %v2254
    %v2604 = vpack.c.bf16 %v2302, %v2266
    %v2605 = vpack.c.bf16 %v2314, %v2278
    %v2606 = vpack.c.bf16 %v2362, %v2326
    %v2607 = vpack.c.bf16 %v2374, %v2338
    %v2608 = vpack.c.bf16 %v2386, %v2350
    %v2609 = vpack.c.bf16 %v2434, %v2398
    %v2610 = vpack.c.bf16 %v2446, %v2410
    %v2611 = vpack.c.bf16 %v2458, %v2422
    %v2612 = vpack.c.bf16 %v2506, %v2470
    %v2613 = vpack.c.bf16 %v2518, %v2482
    %v2614 = vpack.c.bf16 %v2530, %v2494
    %v2615 = vpack.c.bf16 %v2578, %v2542
    %v2616 = vpack.c.bf16 %v2590, %v2554
    %v2617 = vpack.c.bf16 %v2602, %v2566
    %v2618 = vld [vmem:[#allocation8] sm:$0xf]
    %v2619 = vld [vmem:[#allocation8 + $0x4] sm:$0xf]
    %v2620 = vld [vmem:[#allocation8 + $0x8] sm:$0xf]
    %v2621 = vld [vmem:[#allocation8 + $0xc] sm:$0xf]
    %v2622 = vld [vmem:[#allocation8 + $0x10] sm:$0xf]
    %v2623 = vld [vmem:[#allocation8 + $0x14] sm:$0xf]
    %v2624 = vld [vmem:[#allocation8 + $0x18] sm:$0xf]
    %v2625 = vld [vmem:[#allocation8 + $0x1c] sm:$0xf]
    %v2626 = vld [vmem:[#allocation8 + $0x20] sm:$0xf]
    %v2627 = vld [vmem:[#allocation8 + $0x24] sm:$0xf]
    %v2628 = vld [vmem:[#allocation8 + $0x28] sm:$0xf]
    %v2629 = vld [vmem:[#allocation8 + $0x2c] sm:$0xf]
    %v2630 = vld [vmem:[#allocation8 + $0x30] sm:$0xf]
    %v2631 = vld [vmem:[#allocation8 + $0x34] sm:$0xf]
    %v2632 = vld [vmem:[#allocation8 + $0x38] sm:$0xf]
    %v2633 = vld [vmem:[#allocation8 + $0x3c] sm:$0xf]
    %v2634 = vld [vmem:[#allocation8 + $0x40] sm:$0xf]
    %v2635 = vld [vmem:[#allocation8 + $0x44] sm:$0xf]
    %v2636 = vld [vmem:[#allocation8 + $0x48] sm:$0xf]
    %v2637 = vld [vmem:[#allocation8 + $0x4c] sm:$0xf]
    %v2638 = vld [vmem:[#allocation8 + $0x50] sm:$0xf]
    %v2639 = vld [vmem:[#allocation8 + $0x54] sm:$0xf]
    %v2640 = vld [vmem:[#allocation8 + $0x58] sm:$0xf]
    %v2641 = vld [vmem:[#allocation8 + $0x5c] sm:$0xf]
    %v2642 = vld [vmem:[#allocation8 + $0x60] sm:$0xf]
    %v2643 = vld [vmem:[#allocation8 + $0x64] sm:$0xf]
    %v2644 = vld [vmem:[#allocation8 + $0x68] sm:$0xf]
    %v2645 = vld [vmem:[#allocation8 + $0x6c] sm:$0xf]
    %v2646 = vld [vmem:[#allocation8 + $0x70] sm:$0xf]
    %v2647 = vld [vmem:[#allocation8 + $0x74] sm:$0xf]
    %v2648 = vld [vmem:[#allocation8 + $0x78] sm:$0xf]
    %v2649 = vld [vmem:[#allocation8 + $0x7c] sm:$0xf]
    %v2650 = vld [vmem:[#allocation8 + $0x80] sm:$0xf]
    %v2651 = vld [vmem:[#allocation8 + $0x84] sm:$0xf]
    %v2652 = vld [vmem:[#allocation8 + $0x88] sm:$0xf]
    %v2653 = vld [vmem:[#allocation8 + $0x8c] sm:$0xf]
    %v2654 = vld [vmem:[#allocation8 + $0x90] sm:$0xf]
    %v2655 = vld [vmem:[#allocation8 + $0x94] sm:$0xf]
    %v2656 = vld [vmem:[#allocation8 + $0x98] sm:$0xf]
    %v2657 = vld [vmem:[#allocation8 + $0x9c] sm:$0xf]
    %v2658 = vld [vmem:[#allocation8 + $0xa0] sm:$0xf]
    %v2659 = vld [vmem:[#allocation8 + $0xa4] sm:$0xf]
    %v2660 = vld [vmem:[#allocation8 + $0xa8] sm:$0xf]
    %v2661 = vld [vmem:[#allocation8 + $0xac] sm:$0xf]
    %v2662 = vld [vmem:[#allocation8 + $0xb0] sm:$0xf]
    %v2663 = vld [vmem:[#allocation8 + $0xb4] sm:$0xf]
    %v2664 = vld [vmem:[#allocation8 + $0xb8] sm:$0xf]
    %v2665 = vld [vmem:[#allocation8 + $0xbc] sm:$0xf]
    %v2714 = vunpack.c.l.b16 %v2618
    %v2715 = vunpack.c.l.b16 %v2619
    %v2716 = vunpack.c.l.b16 %v2620
    %v2717 = vunpack.c.l.b16 %v2621
    %v2718 = vunpack.c.l.b16 %v2622
    %v2719 = vunpack.c.l.b16 %v2623
    %v2720 = vunpack.c.l.b16 %v2624
    %v2721 = vunpack.c.l.b16 %v2625
    %v2722 = vunpack.c.l.b16 %v2626
    %v2723 = vunpack.c.l.b16 %v2627
    %v2724 = vunpack.c.l.b16 %v2628
    %v2725 = vunpack.c.l.b16 %v2629
    %v2726 = vunpack.c.l.b16 %v2630
    %v2727 = vunpack.c.l.b16 %v2631
    %v2728 = vunpack.c.l.b16 %v2632
    %v2729 = vunpack.c.l.b16 %v2633
    %v2730 = vunpack.c.l.b16 %v2634
    %v2731 = vunpack.c.l.b16 %v2635
    %v2732 = vunpack.c.l.b16 %v2636
    %v2733 = vunpack.c.l.b16 %v2637
    %v2734 = vunpack.c.l.b16 %v2638
    %v2735 = vunpack.c.l.b16 %v2639
    %v2736 = vunpack.c.l.b16 %v2640
    %v2737 = vunpack.c.l.b16 %v2641
    %v2738 = vunpack.c.l.b16 %v2642
    %v2739 = vunpack.c.l.b16 %v2643
    %v2740 = vunpack.c.l.b16 %v2644
    %v2741 = vunpack.c.l.b16 %v2645
    %v2742 = vunpack.c.l.b16 %v2646
    %v2743 = vunpack.c.l.b16 %v2647
    %v2744 = vunpack.c.l.b16 %v2648
    %v2745 = vunpack.c.l.b16 %v2649
    %v2746 = vunpack.c.l.b16 %v2650
    %v2747 = vunpack.c.l.b16 %v2651
    %v2748 = vunpack.c.l.b16 %v2652
    %v2749 = vunpack.c.l.b16 %v2653
    %v2750 = vunpack.c.l.b16 %v2654
    %v2751 = vunpack.c.l.b16 %v2655
    %v2752 = vunpack.c.l.b16 %v2656
    %v2753 = vunpack.c.l.b16 %v2657
    %v2754 = vunpack.c.l.b16 %v2658
    %v2755 = vunpack.c.l.b16 %v2659
    %v2756 = vunpack.c.l.b16 %v2660
    %v2757 = vunpack.c.l.b16 %v2661
    %v2758 = vunpack.c.l.b16 %v2662
    %v2759 = vunpack.c.l.b16 %v2663
    %v2760 = vunpack.c.l.b16 %v2664
    %v2761 = vunpack.c.l.b16 %v2665
    %v2762 = vpack.c.b16 %v2715, %v2714
    %v2763 = vpack.c.b16 %v2717, %v2716
    %v2764 = vpack.c.b16 %v2719, %v2718
    %v2765 = vpack.c.b16 %v2721, %v2720
    %v2766 = vpack.c.b16 %v2723, %v2722
    %v2767 = vpack.c.b16 %v2725, %v2724
    %v2768 = vpack.c.b16 %v2727, %v2726
    %v2769 = vpack.c.b16 %v2729, %v2728
    %v2770 = vpack.c.b16 %v2731, %v2730
    %v2771 = vpack.c.b16 %v2733, %v2732
    %v2772 = vpack.c.b16 %v2735, %v2734
    %v2773 = vpack.c.b16 %v2737, %v2736
    %v2774 = vpack.c.b16 %v2739, %v2738
    %v2775 = vpack.c.b16 %v2741, %v2740
    %v2776 = vpack.c.b16 %v2743, %v2742
    %v2777 = vpack.c.b16 %v2745, %v2744
    %v2778 = vpack.c.b16 %v2747, %v2746
    %v2779 = vpack.c.b16 %v2749, %v2748
    %v2780 = vpack.c.b16 %v2751, %v2750
    %v2781 = vpack.c.b16 %v2753, %v2752
    %v2782 = vpack.c.b16 %v2755, %v2754
    %v2783 = vpack.c.b16 %v2757, %v2756
    %v2784 = vpack.c.b16 %v2759, %v2758
    %v2785 = vpack.c.b16 %v2761, %v2760
    %2810 = vmatpush.bf16.msra.mxu0 %v2769
    %2811 = vmatpush.bf16.msra.mxu0 %v2768
    %2812 = vmatpush.bf16.msra.mxu0 %v2767
    %2813 = vmatpush.bf16.msra.mxu0 %v2766
    %2814 = vmatpush.bf16.msra.mxu0 %v2765
    %2815 = vmatpush.bf16.msra.mxu0 %v2764
    %2816 = vmatpush.bf16.msra.mxu0 %v2763
    %2817 = vmatpush.bf16.msra.mxu0 %v2762
    %2818 = vmatmul.bf16.gmra.mxu0 %v2603
    %v2819 = vpop.f32.mrf.mxu0
    %v2820 = vadd.f32 0.0, %v2819
    %v2821 = vpop.f32.mrf.mxu0
    %v2822 = vadd.f32 0.0, %v2821
    %2823 = vmatmul.bf16.gmra.mxu0 %v2606
    %v2824 = vpop.f32.mrf.mxu0
    %v2825 = vadd.f32 0.0, %v2824
    %v2826 = vpop.f32.mrf.mxu0
    %v2827 = vadd.f32 0.0, %v2826
    %2828 = vmatmul.bf16.gmra.mxu0 %v2609
    %v2829 = vpop.f32.mrf.mxu0
    %v2830 = vadd.f32 0.0, %v2829
    %v2831 = vpop.f32.mrf.mxu0
    %v2832 = vadd.f32 0.0, %v2831
    %2833 = vmatmul.bf16.gmra.mxu0 %v2612
    %v2834 = vpop.f32.mrf.mxu0
    %v2835 = vadd.f32 0.0, %v2834
    %v2836 = vpop.f32.mrf.mxu0
    %v2837 = vadd.f32 0.0, %v2836
    %2838 = vmatmul.bf16.gmra.mxu0 %v2615
    %v2839 = vpop.f32.mrf.mxu0
    %v2840 = vadd.f32 0.0, %v2839
    %v2841 = vpop.f32.mrf.mxu0
    %v2842 = vadd.f32 0.0, %v2841
    %2843 = vdwg.mxu0
    %2844 = vmatpush.bf16.msra.mxu0 %v2777
    %2845 = vmatpush.bf16.msra.mxu0 %v2776
    %2846 = vmatpush.bf16.msra.mxu0 %v2775
    %2847 = vmatpush.bf16.msra.mxu0 %v2774
    %2848 = vmatpush.bf16.msra.mxu0 %v2773
    %2849 = vmatpush.bf16.msra.mxu0 %v2772
    %2850 = vmatpush.bf16.msra.mxu0 %v2771
    %2851 = vmatpush.bf16.msra.mxu0 %v2770
    %2852 = vmatmul.bf16.gmra.mxu0 %v2604
    %v2853 = vpop.f32.mrf.mxu0
    %v2854 = vadd.f32 %v2820, %v2853
    %v2855 = vpop.f32.mrf.mxu0
    %v2856 = vadd.f32 %v2822, %v2855
    %2857 = vmatmul.bf16.gmra.mxu0 %v2607
    %v2858 = vpop.f32.mrf.mxu0
    %v2859 = vadd.f32 %v2825, %v2858
    %v2860 = vpop.f32.mrf.mxu0
    %v2861 = vadd.f32 %v2827, %v2860
    %2862 = vmatmul.bf16.gmra.mxu0 %v2610
    %v2863 = vpop.f32.mrf.mxu0
    %v2864 = vadd.f32 %v2830, %v2863
    %v2865 = vpop.f32.mrf.mxu0
    %v2866 = vadd.f32 %v2832, %v2865
    %2867 = vmatmul.bf16.gmra.mxu0 %v2613
    %v2868 = vpop.f32.mrf.mxu0
    %v2869 = vadd.f32 %v2835, %v2868
    %v2870 = vpop.f32.mrf.mxu0
    %v2871 = vadd.f32 %v2837, %v2870
    %2872 = vmatmul.bf16.gmra.mxu0 %v2616
    %v2873 = vpop.f32.mrf.mxu0
    %v2874 = vadd.f32 %v2840, %v2873
    %v2875 = vpop.f32.mrf.mxu0
    %v2876 = vadd.f32 %v2842, %v2875
    %2877 = vdwg.mxu0
    %2878 = vmatpush.bf16.msra.mxu0 %v2785
    %2879 = vmatpush.bf16.msra.mxu0 %v2784
    %2880 = vmatpush.bf16.msra.mxu0 %v2783
    %2881 = vmatpush.bf16.msra.mxu0 %v2782
    %2882 = vmatpush.bf16.msra.mxu0 %v2781
    %2883 = vmatpush.bf16.msra.mxu0 %v2780
    %2884 = vmatpush.bf16.msra.mxu0 %v2779
    %2885 = vmatpush.bf16.msra.mxu0 %v2778
    %2886 = vmatmul.bf16.gmra.mxu0 %v2605
    %v2887 = vpop.f32.mrf.mxu0
    %v2888 = vadd.f32 %v2854, %v2887
    %v2889 = vpop.f32.mrf.mxu0
    %v2890 = vadd.f32 %v2856, %v2889
    %2891 = vmatmul.bf16.gmra.mxu0 %v2608
    %v2892 = vpop.f32.mrf.mxu0
    %v2893 = vadd.f32 %v2859, %v2892
    %v2894 = vpop.f32.mrf.mxu0
    %v2895 = vadd.f32 %v2861, %v2894
    %2896 = vmatmul.bf16.gmra.mxu0 %v2611
    %v2897 = vpop.f32.mrf.mxu0
    %v2898 = vadd.f32 %v2864, %v2897
    %v2899 = vpop.f32.mrf.mxu0
    %v2900 = vadd.f32 %v2866, %v2899
    %2901 = vmatmul.bf16.gmra.mxu0 %v2614
    %v2902 = vpop.f32.mrf.mxu0
    %v2903 = vadd.f32 %v2869, %v2902
    %v2904 = vpop.f32.mrf.mxu0
    %v2905 = vadd.f32 %v2871, %v2904
    %2906 = vmatmul.bf16.gmra.mxu0 %v2617
    %v2907 = vpop.f32.mrf.mxu0
    %v2908 = vadd.f32 %v2874, %v2907
    %v2909 = vpop.f32.mrf.mxu0
    %v2910 = vadd.f32 %v2876, %v2909
    %2911 = vdwg.mxu0
    %2912 = vst [vmem:[#allocation2] sm:$0xff] %v2888
    %2913 = vst [vmem:[#allocation2 + $0x8] sm:$0xff] %v2890
    %2914 = vst [vmem:[#allocation2 + $0x10] sm:$0xff] %v2893
    %2915 = vst [vmem:[#allocation2 + $0x18] sm:$0xff] %v2895
    %2916 = vst [vmem:[#allocation2 + $0x20] sm:$0xff] %v2898
    %2917 = vst [vmem:[#allocation2 + $0x28] sm:$0xff] %v2900
    %2918 = vst [vmem:[#allocation2 + $0x30] sm:$0xff] %v2903
    %2919 = vst [vmem:[#allocation2 + $0x38] sm:$0xff] %v2905
    %2920 = vst [vmem:[#allocation2 + $0x40] sm:$0xff] %v2908
    %2921 = vst [vmem:[#allocation2 + $0x48] sm:$0xff] %v2910
    %v2922 = vld [vmem:[#allocation2] sm:$0xff]
    %s2923 = scalar_lea.vmem [#allocation2], 40
    %v2924 = vld [vmem:[%s2923] sm:$0xff]
    %v2925 = vmax.f32 %v2922, 1e-05
    %v2926 = vlog2.pop %v2925
    %v2927 = vmul.f32 %v2926, 0.6931472
    %v2928 = vmul.f32 %v2927, 0.4342945
    %v2929 = vmax.f32 %v2924, 1e-05
    %v2930 = vlog2.pop %v2929
    %v2931 = vmul.f32 %v2930, 0.6931472
    %v2932 = vmul.f32 %v2931, 0.4342945
    %v2933 = vsub.f32 %v2922, %v2924
    %v2934 = vand.u32 2147483647, %v2933
    %v2935 = vadd.f32 %v2934, 0.0
    %v2936 = vsub.f32 %v2928, %v2932
    %v2937 = vand.u32 2147483647, %v2936
    %v2938 = vadd.f32 %v2937, 0.0
    %s2939 = scalar_lea.vmem [#allocation2], 8
    %v2940 = vld [vmem:[%s2939] sm:$0xff]
    %s2941 = scalar_lea.vmem [#allocation2], 48
    %v2942 = vld [vmem:[%s2941] sm:$0xff]
    %v2943 = vmax.f32 %v2940, 1e-05
    %v2944 = vlog2.pop %v2943
    %v2945 = vmul.f32 %v2944, 0.6931472
    %v2946 = vmul.f32 %v2945, 0.4342945
    %v2947 = vmax.f32 %v2942, 1e-05
    %v2948 = vlog2.pop %v2947
    %v2949 = vmul.f32 %v2948, 0.6931472
    %v2950 = vmul.f32 %v2949, 0.4342945
    %v2951 = vsub.f32 %v2940, %v2942
    %v2952 = vand.u32 2147483647, %v2951
    %v2953 = vadd.f32 %v2935, %v2952
    %v2954 = vsub.f32 %v2946, %v2950
    %v2955 = vand.u32 2147483647, %v2954
    %v2956 = vadd.f32 %v2938, %v2955
    %s2957 = scalar_lea.vmem [#allocation2], 16
    %v2958 = vld [vmem:[%s2957] sm:$0xff]
    %s2959 = scalar_lea.vmem [#allocation2], 56
    %v2960 = vld [vmem:[%s2959] sm:$0xff]
    %v2961 = vmax.f32 %v2958, 1e-05
    %v2962 = vlog2.pop %v2961
    %v2963 = vmul.f32 %v2962, 0.6931472
    %v2964 = vmul.f32 %v2963, 0.4342945
    %v2965 = vmax.f32 %v2960, 1e-05
    %v2966 = vlog2.pop %v2965
    %v2967 = vmul.f32 %v2966, 0.6931472
    %v2968 = vmul.f32 %v2967, 0.4342945
    %v2969 = vsub.f32 %v2958, %v2960
    %v2970 = vand.u32 2147483647, %v2969
    %v2971 = vadd.f32 %v2953, %v2970
    %v2972 = vsub.f32 %v2964, %v2968
    %v2973 = vand.u32 2147483647, %v2972
    %v2974 = vadd.f32 %v2956, %v2973
    %s2975 = scalar_lea.vmem [#allocation2], 24
    %v2976 = vld [vmem:[%s2975] sm:$0xff]
    %s2977 = scalar_lea.vmem [#allocation2], 64
    %v2978 = vld [vmem:[%s2977] sm:$0xff]
    %v2979 = vmax.f32 %v2976, 1e-05
    %v2980 = vlog2.pop %v2979
    %v2981 = vmul.f32 %v2980, 0.6931472
    %v2982 = vmul.f32 %v2981, 0.4342945
    %v2983 = vmax.f32 %v2978, 1e-05
    %v2984 = vlog2.pop %v2983
    %v2985 = vmul.f32 %v2984, 0.6931472
    %v2986 = vmul.f32 %v2985, 0.4342945
    %v2987 = vsub.f32 %v2976, %v2978
    %v2988 = vand.u32 2147483647, %v2987
    %v2989 = vadd.f32 %v2971, %v2988
    %v2990 = vsub.f32 %v2982, %v2986
    %v2991 = vand.u32 2147483647, %v2990
    %v2992 = vadd.f32 %v2974, %v2991
    %s2993 = scalar_lea.vmem [#allocation2], 32
    %v2994 = vld [vmem:[%s2993] sm:$0xff]
    %s2995 = scalar_lea.vmem [#allocation2], 72
    %v2996 = vld [vmem:[%s2995] sm:$0xff]
    %v2997 = vmax.f32 %v2994, 1e-05
    %v2998 = vlog2.pop %v2997
    %v2999 = vmul.f32 %v2998, 0.6931472
    %v3000 = vmul.f32 %v2999, 0.4342945
    %v3001 = vmax.f32 %v2996, 1e-05
    %v3002 = vlog2.pop %v3001
    %v3003 = vmul.f32 %v3002, 0.6931472
    %v3004 = vmul.f32 %v3003, 0.4342945
    %v3005 = vsub.f32 %v2994, %v2996
    %v3006 = vand.u32 2147483647, %v3005
    %v3007 = vadd.f32 %v2989, %v3006
    %v3008 = vsub.f32 %v3000, %v3004
    %v3009 = vand.u32 2147483647, %v3008
    %v3010 = vadd.f32 %v2992, %v3009
    %3011 = vst [vmem:[#allocation9] sm:$0xff] %v3007
    %v3012 = vmul.f32 %v3010, 2.0
    %3013 = vst [vmem:[#allocation10] sm:$0xff] %v3012
    // Predicated region
    $region26: #{tpu_custom_call.1} parent=1 // pred_check
      _
    $region27: #{tpu_custom_call.1} parent=1 // pred_check_branch
      %3015 = sbr.rel (0) target = $region29
    $region28: #{tpu_custom_call.1} parent=1 // pred_region
      %3017 = vsyncadd [#allocation5], 0
      %s3019 = sshll.u32 [#allocation9], 4
      %s3020 = int_to_ptr.vmem [resolvable:$true] %s3019
      %s3021 = sshll.u32 %s3, 4
      %s3022 = int_to_ptr.hbm [resolvable:$true] %s3021
      %3024 = dma.vmem_to_hbm [thread:$0]  %s3020, 128, %s3022, [#allocation5]
    $region29: #{tpu_custom_call.1} parent=1 // pred_fallthru
      _
    // Predicated region
    $region30: #{tpu_custom_call.1} parent=1 // pred_check
      _
    $region31: #{tpu_custom_call.1} parent=1 // pred_check_branch
      %3026 = sbr.rel (0) target = $region33
    $region32: #{tpu_custom_call.1} parent=1 // pred_region
      %3028 = vsyncadd [#allocation11], 0
      %s3030 = sshll.u32 [#allocation10], 4
      %s3031 = int_to_ptr.vmem [resolvable:$true] %s3030
      %s3032 = sshll.u32 %s4, 4
      %s3033 = int_to_ptr.hbm [resolvable:$true] %s3032
      %3035 = dma.vmem_to_hbm [thread:$0]  %s3031, 128, %s3033, [#allocation11]
    $region33: #{tpu_custom_call.1} parent=1 // pred_fallthru
      _
    // Predicated region
    $region34: #{tpu_custom_call.1} parent=1 // pred_check
      _
    $region35: #{tpu_custom_call.1} parent=1 // pred_check_branch
      %3037 = sbr.rel (0) target = $region37
    $region36: #{tpu_custom_call.1} parent=1 // pred_region
      %3039 = dma.done [#allocation5], 128
    $region37: #{tpu_custom_call.1} parent=1 // pred_fallthru
      _
    // Predicated region
    $region38: #{tpu_custom_call.1} parent=1 // pred_check
      _
    $region39: #{tpu_custom_call.1} parent=1 // pred_check_branch
      %3041 = sbr.rel (0) target = $region41
    $region40: #{tpu_custom_call.1} parent=1 // pred_region
      %3043 = dma.done [#allocation11], 128
    $region41: #{tpu_custom_call.1} parent=1 // pred_fallthru
      _
    %3044 = vsyncpa [#allocation4], 1
    %3045 = vsyncpa [#allocation7], 1
    %3046 = vsyncpa [#allocation5], 1
    %3047 = vsyncpa [#allocation11], 1

</llo_original>
